<compile_context>
chip_gen: v5e
topology: v5e:2x2
jax: 0.10.0
libtpu: 0.0.40
codegen_flags: <defaults>
</compile_context>

<pallas_src>
import jax
import jax.numpy as jnp
from jax.experimental import pallas as pl
from jax.experimental.pallas import tpu as pltpu


# --------------------------------------------------------------------------
# Kernel
# --------------------------------------------------------------------------
def basic_block_kernel(x_ref, s1_ref, b1_ref, w1_ref, b2_ref, w2_ref,
                       o_ref, pad1, pad2):
    # x_ref : (B, G, L)   B images; G = H/R group-rows, L = R*W*C lanes
    # s1/b1 : (1, L)      folded bn1 scale / bias, tiled along R*W
    # w1    : (3, L, L)   banded conv1 weights (bf16), bn2 scale pre-folded
    # b2    : (1, L)      folded bn2 bias
    # w2    : (3, L, L)   banded conv2 weights (bf16)
    # o_ref : (B, G, L)
    # pad1/pad2 : VMEM (B*(G+1)+1, L) f32 stacked padded image block; rows
    #             b*(G+1) (b = 0..B) are the shared zero halo/separator rows.
    B, G, L_in = x_ref.shape
    L_out = w1_ref.shape[2]
    S = G + 1                       # per-image row stride in the stacked pad
    M = B * S + 1                   # total stacked rows
    bf16 = jnp.bfloat16

    zrow_in = jnp.zeros((1, L_in), pad1.dtype)
    zrow_out = jnp.zeros((1, L_out), pad2.dtype)

    # Zero the B+1 halo/separator rows of pad1 (re-zeroed every grid step:
    # cheap, and megacore-safe since scratch is per-core).
    for b in range(B + 1):
        pad1[b * S: b * S + 1, :] = zrow_in

    # ---- bn1 (folded affine) + relu, per image into the stacked scratch ----
    # (x is consumed immediately; it is re-loaded at the residual add so it
    #  does not stay live in vregs across both convs.)
    for b in range(B):
        a1 = jnp.maximum(x_ref[b] * s1_ref[...] + b1_ref[...], 0.0)
        pad1[1 + b * S: 1 + b * S + G, :] = a1

    # ---- conv1: 3 shifted banded matmuls over the whole image stack -------
    # (bn2 scale s2 is already folded into w1's output columns.)
    acc1 = jnp.dot(pad1[0:M - 2, :].astype(bf16), w1_ref[0],
                   preferred_element_type=jnp.float32)
    acc1 += jnp.dot(pad1[1:M - 1, :].astype(bf16), w1_ref[1],
                    preferred_element_type=jnp.float32)
    acc1 += jnp.dot(pad1[2:M, :].astype(bf16), w1_ref[2],
                    preferred_element_type=jnp.float32)

    # ---- bn2 bias + relu (scale folded into conv1 weights) ----------------
    # Bulk-store, then re-zero the halo/separator rows that the bulk store
    # overwrote (those rows of acc1 are don't-care separator outputs).
    pad2[1:M - 1, :] = jnp.maximum(acc1 + b2_ref[...], 0.0)
    for b in range(B + 1):
        pad2[b * S: b * S + 1, :] = zrow_out

    # ---- conv2 -------------------------------------------------------------
    acc2 = jnp.dot(pad2[0:M - 2, :].astype(bf16), w2_ref[0],
                   preferred_element_type=jnp.float32)
    acc2 += jnp.dot(pad2[1:M - 1, :].astype(bf16), w2_ref[1],
                    preferred_element_type=jnp.float32)
    acc2 += jnp.dot(pad2[2:M, :].astype(bf16), w2_ref[2],
                    preferred_element_type=jnp.float32)

    # ---- residual add (stride=1, downsample=None): re-load x per image ----
    for b in range(B):
        o_ref[b] = (acc2[b * S: b * S + G, :] + x_ref[b]).astype(o_ref.dtype)


# --------------------------------------------------------------------------
# Host-side preparation helpers
# --------------------------------------------------------------------------
def _rows_per_group(H, W, C, target_lanes=128):
    """How many consecutive image rows to pack per lane-row (R*W*C ~ 128)."""
    R = max(1, target_lanes // (W * C))
    while R > 1 and H % R != 0:
        R -= 1
    return R


def _pick_batch_tile(N, G, target_m=256):
    """Largest divisor of N keeping the stacked matmul M = B*(G+1)+1 under
    `target_m` while preferring a grid length >= 2 (v7x: both TensorCores)."""
    candidates = [d for d in range(1, N + 1) if N % d == 0]
    pref = [d for d in candidates if N // d >= 2] or candidates
    fit = [d for d in pref if d * (G + 1) + 1 <= target_m] or [pref[0]]
    return max(fit)


def make_banded_conv_mats(w_hwio, W, R):
    """Fold a 3x3 'SAME' conv into 3 dense (R*W*Cin, R*W*Cout) matrices, one
    per group-row shift in {-1, 0, +1}.  W-direction zero padding and the kx
    taps are encoded as zero/weight entries, so the kernel needs no im2col."""
    KH, KW, Cin, Cout = w_hwio.shape
    P = R * W
    p_in = jnp.arange(P)
    p_out = jnp.arange(P)
    h_in, w_in = (p_in // W)[:, None], (p_in % W)[:, None]
    h_out, w_out = (p_out // W)[None, :], (p_out % W)[None, :]
    kx = w_in - w_out + KW // 2                            # (P, P)
    mats = []
    for s in (-1, 0, 1):
        ky = s * R + h_in - h_out + KH // 2                # (P, P)
        valid = (ky >= 0) & (ky < KH) & (kx >= 0) & (kx < KW)
        w_sel = w_hwio[jnp.clip(ky, 0, KH - 1), jnp.clip(kx, 0, KW - 1)]
        w_sel = jnp.where(valid[:, :, None, None], w_sel, 0.0)
        # (p_in, p_out, ci, co) -> (p_in*Cin, p_out*Cout)
        mats.append(jnp.transpose(w_sel, (0, 2, 1, 3)).reshape(P * Cin, P * Cout))
    return jnp.stack(mats, axis=0)


def prepare_block_params(s1, b1, w1_hwio, s2, b2, w2_hwio, W, R):
    """Tile folded BN params along R*W and build banded bf16 conv weights.
    The bn2 scale s2 is folded into conv1's output columns (per-channel scale
    commutes with the conv)."""
    C = s1.shape[0]
    L = R * W * C
    s1t = jnp.tile(s1, R * W).reshape(1, L)
    b1t = jnp.tile(b1, R * W).reshape(1, L)
    b2t = jnp.tile(b2, R * W).reshape(1, L)
    s2t = jnp.tile(s2, R * W)                              # (L,)
    wb1 = make_banded_conv_mats(w1_hwio, W, R)             # (3, L, L) f32
    wb1 = (wb1 * s2t[None, None, :]).astype(jnp.bfloat16)  # fold bn2 scale
    wb2 = make_banded_conv_mats(w2_hwio, W, R).astype(jnp.bfloat16)
    return s1t, b1t, wb1, b2t, wb2


def pack_nchw(x_nchw, R):
    """NCHW -> lane-dense packed (N, G, L): R consecutive image rows/lane-row."""
    N, C, H, W = x_nchw.shape
    G = H // R
    return jnp.transpose(x_nchw, (0, 2, 3, 1)).reshape(N, G, R * W * C)


def unpack_to_nchw(x_pkd, C, H, W):
    N = x_pkd.shape[0]
    return jnp.transpose(x_pkd.reshape(N, H, W, C), (0, 3, 1, 2))


# --------------------------------------------------------------------------
# pallas_call wrapper (operates in the packed layout; chain blocks here)
# --------------------------------------------------------------------------
def basic_block_forward_packed(x_pkd, s1t, b1t, wb1, b2t, wb2, *,
                               batch_tile=None):
    """One stride-1 identity residual block on lane-dense activations.
    x_pkd: (N, G, L) f32.  Returns (N, G, L) f32 (same packed layout, so
    consecutive blocks can be chained without NCHW<->NHWC transposes)."""
    N, G, L = x_pkd.shape
    L_out = wb1.shape[2]
    assert L == L_out, "stride=1 identity block requires inplanes == planes"
    assert L % 128 == 0, "packed lane dim must be a multiple of 128"

    B = batch_tile if batch_tile is not None else _pick_batch_tile(N, G)
    assert N % B == 0
    Mtot = B * (G + 1) + 1          # stacked scratch rows (shared zero rows)
    grid = (N // B,)

    # TODO(synk): for real weight sizes, single-buffer the grid-invariant
    #             inputs (pipeline_mode=pl.Buffered(1)) and switch pad1/pad2
    #             to bf16 after checking the lowering for packed-sublane
    #             copies; negligible at L=128.
    out = pl.pallas_call(
        basic_block_kernel,
        out_shape=jax.ShapeDtypeStruct((N, G, L), jnp.float32),
        grid_spec=pltpu.PrefetchScalarGridSpec(
            num_scalar_prefetch=0,
            grid=grid,
            in_specs=[
                pl.BlockSpec((B, G, L), lambda n: (n, 0, 0)),
                pl.BlockSpec((1, L), lambda n: (0, 0)),
                pl.BlockSpec((1, L), lambda n: (0, 0)),
                pl.BlockSpec((3, L, L), lambda n: (0, 0, 0)),
                pl.BlockSpec((1, L), lambda n: (0, 0)),
                pl.BlockSpec((3, L, L), lambda n: (0, 0, 0)),
            ],
            out_specs=pl.BlockSpec((B, G, L), lambda n: (n, 0, 0)),
            scratch_shapes=[
                pltpu.VMEM((Mtot, L), jnp.float32),
                pltpu.VMEM((Mtot, L), jnp.float32),
            ],
        ),
        compiler_params=pltpu.CompilerParams(
            dimension_semantics=("parallel",),      # megacore on v7x
            # Tiny footprint here (<1 MiB); re-check against v7x's 64 MiB
            # physical VMEM (cap ~48-56 MiB) when B/weights grow.
            vmem_limit_bytes=32 * 1024 * 1024),
    )(x_pkd, s1t, b1t, wb1, b2t, wb2)
    return out


# --------------------------------------------------------------------------
# Pure-JAX reference (same folded-BN semantics, bf16 conv, f32 accumulate)
# --------------------------------------------------------------------------
def reference_block(x_nchw, s1, b1, w1_hwio, s2, b2, w2_hwio):
    bf = jnp.bfloat16
    x = jnp.transpose(x_nchw, (0, 2, 3, 1))
    a1 = jnp.maximum(x * s1 + b1, 0.0)
    c1 = jax.lax.conv_general_dilated(
        a1.astype(bf), w1_hwio.astype(bf), (1, 1), "SAME",
        dimension_numbers=("NHWC", "HWIO", "NHWC"),
        preferred_element_type=jnp.float32)
    a2 = jnp.maximum(c1 * s2 + b2, 0.0)
    c2 = jax.lax.conv_general_dilated(
        a2.astype(bf), w2_hwio.astype(bf), (1, 1), "SAME",
        dimension_numbers=("NHWC", "HWIO", "NHWC"),
        preferred_element_type=jnp.float32)
    return jnp.transpose(c2 + x, (0, 3, 1, 2))


# --------------------------------------------------------------------------
if __name__ == "__main__":
    # Small toy config: inplanes = planes = 4, stride = 1, two chained blocks.
    # N=8 so that B_tile=4 gives M=37-row matmuls and a grid of 2 ("parallel")
    # steps -> both v7x TensorCores get work.
    N, C, H, W = 8, 4, 16, 16
    eps = 1e-5

    def make_block_params(key):
        ks = jax.random.split(key, 10)
        g1 = 1.0 + 0.1 * jax.random.normal(ks[0], (C,), jnp.float32)
        be1 = 0.1 * jax.random.normal(ks[1], (C,), jnp.float32)
        rm1 = 0.1 * jax.random.normal(ks[2], (C,), jnp.float32)
        rv1 = jax.random.uniform(ks[3], (C,), jnp.float32, 0.5, 1.5)
        s1 = g1 / jnp.sqrt(rv1 + eps)
        b1 = be1 - rm1 * s1
        g2 = 1.0 + 0.1 * jax.random.normal(ks[4], (C,), jnp.float32)
        be2 = 0.1 * jax.random.normal(ks[5], (C,), jnp.float32)
        rm2 = 0.1 * jax.random.normal(ks[6], (C,), jnp.float32)
        rv2 = jax.random.uniform(ks[7], (C,), jnp.float32, 0.5, 1.5)
        s2 = g2 / jnp.sqrt(rv2 + eps)
        b2 = be2 - rm2 * s2
        # conv weights, PyTorch layout (Cout, Cin, 3, 3) -> HWIO
        w1 = 0.2 * jax.random.normal(ks[8], (C, C, 3, 3), jnp.float32)
        w2 = 0.2 * jax.random.normal(ks[9], (C, C, 3, 3), jnp.float32)
        return (s1, b1, jnp.transpose(w1, (2, 3, 1, 0)),
                s2, b2, jnp.transpose(w2, (2, 3, 1, 0)))

    key = jax.random.PRNGKey(0)
    kx, k1, k2 = jax.random.split(key, 3)
    x = jax.random.normal(kx, (N, C, H, W), jnp.float32)
    p1 = make_block_params(k1)
    p2 = make_block_params(k2)

    R = _rows_per_group(H, W, C)

    # Two consecutive residual blocks kept in the lane-dense packed layout
    # between blocks: the NCHW<->packed transposes happen only at the ends.
    x_pkd = pack_nchw(x, R)
    y_pkd = basic_block_forward_packed(
        x_pkd, *prepare_block_params(*p1, W=W, R=R))
    y_pkd = basic_block_forward_packed(
        y_pkd, *prepare_block_params(*p2, W=W, R=R))
    out = unpack_to_nchw(y_pkd, C, H, W)
    out = jax.block_until_ready(out)

    ref = reference_block(reference_block(x, *p1), *p2)
    ref = jax.block_until_ready(ref)

    assert out.shape == (N, C, H, W)
    max_err = float(jnp.max(jnp.abs(out - ref)))
    assert jnp.allclose(out, ref, atol=5e-2, rtol=1e-2), f"max_err={max_err}"

    print("KERNEL_OK")
</pallas_src>

<mosaic_0001>
module attributes {stable_mosaic.version = 11 : i64} {
  func.func @basic_block_kernel(%arg0: i32, %arg1: memref<4x8x128xf32, #tpu.memory_space<vmem>>, %arg2: memref<1x128xf32, #tpu.memory_space<vmem>>, %arg3: memref<1x128xf32, #tpu.memory_space<vmem>>, %arg4: memref<3x128x128xbf16, #tpu.memory_space<vmem>>, %arg5: memref<1x128xf32, #tpu.memory_space<vmem>>, %arg6: memref<3x128x128xbf16, #tpu.memory_space<vmem>>, %arg7: memref<4x8x128xf32, #tpu.memory_space<vmem>>, %arg8: memref<37x128xf32, #tpu.memory_space<vmem>>, %arg9: memref<37x128xf32, #tpu.memory_space<vmem>>) attributes {dimension_semantics = [#tpu.dimension_semantics<parallel>], iteration_bounds = array<i64: 2>, scalar_prefetch = 0 : i64, scratch_operands = 2 : i64, tpu.core_type = #tpu.core_type<tc>, window_params = [{transform_indices = @transform_0, window_bounds = array<i64: 4, 8, 128>}, {pipeline_mode = #tpu.pipeline_mode<synchronous>, transform_indices = @transform_1, window_bounds = array<i64: 1, 128>}, {pipeline_mode = #tpu.pipeline_mode<synchronous>, transform_indices = @transform_2, window_bounds = array<i64: 1, 128>}, {pipeline_mode = #tpu.pipeline_mode<synchronous>, transform_indices = @transform_3, window_bounds = array<i64: 3, 128, 128>}, {pipeline_mode = #tpu.pipeline_mode<synchronous>, transform_indices = @transform_4, window_bounds = array<i64: 1, 128>}, {pipeline_mode = #tpu.pipeline_mode<synchronous>, transform_indices = @transform_5, window_bounds = array<i64: 3, 128, 128>}, {transform_indices = @transform_6, window_bounds = array<i64: 4, 8, 128>}]} {
    %cst = arith.constant 0.000000e+00 : f32
    %0 = vector.broadcast %cst : f32 to vector<1x128xf32>
    %cst_0 = arith.constant 0.000000e+00 : f32
    %1 = vector.broadcast %cst_0 : f32 to vector<1x128xf32>
    %c0 = arith.constant 0 : index
    %c0_1 = arith.constant 0 : index
    %2 = vector.load %arg8[%c0, %c0_1] : memref<37x128xf32, #tpu.memory_space<vmem>>, vector<1x128xf32>
    tpu.vector_store %arg8[%c0, %c0_1], %0 {strides = array<i32>} : memref<37x128xf32, #tpu.memory_space<vmem>>, vector<1x128xf32>,
    %c9 = arith.constant 9 : index
    %c0_2 = arith.constant 0 : index
    %3 = vector.load %arg8[%c9, %c0_2] : memref<37x128xf32, #tpu.memory_space<vmem>>, vector<1x128xf32>
    tpu.vector_store %arg8[%c9, %c0_2], %0 {strides = array<i32>} : memref<37x128xf32, #tpu.memory_space<vmem>>, vector<1x128xf32>,
    %c18 = arith.constant 18 : index
    %c0_3 = arith.constant 0 : index
    %4 = vector.load %arg8[%c18, %c0_3] : memref<37x128xf32, #tpu.memory_space<vmem>>, vector<1x128xf32>
    tpu.vector_store %arg8[%c18, %c0_3], %0 {strides = array<i32>} : memref<37x128xf32, #tpu.memory_space<vmem>>, vector<1x128xf32>,
    %c27 = arith.constant 27 : index
    %c0_4 = arith.constant 0 : index
    %5 = vector.load %arg8[%c27, %c0_4] : memref<37x128xf32, #tpu.memory_space<vmem>>, vector<1x128xf32>
    tpu.vector_store %arg8[%c27, %c0_4], %0 {strides = array<i32>} : memref<37x128xf32, #tpu.memory_space<vmem>>, vector<1x128xf32>,
    %c36 = arith.constant 36 : index
    %c0_5 = arith.constant 0 : index
    %6 = vector.load %arg8[%c36, %c0_5] : memref<37x128xf32, #tpu.memory_space<vmem>>, vector<1x128xf32>
    tpu.vector_store %arg8[%c36, %c0_5], %0 {strides = array<i32>} : memref<37x128xf32, #tpu.memory_space<vmem>>, vector<1x128xf32>,
    %c0_6 = arith.constant 0 : index
    %c0_7 = arith.constant 0 : index
    %c0_8 = arith.constant 0 : index
    %7 = vector.load %arg1[%c0_6, %c0_7, %c0_8] : memref<4x8x128xf32, #tpu.memory_space<vmem>>, vector<1x8x128xf32>
    %8 = vector.shape_cast %7 : vector<1x8x128xf32> to vector<8x128xf32>
    %c0_9 = arith.constant 0 : index
    %c0_10 = arith.constant 0 : index
    %9 = vector.load %arg2[%c0_9, %c0_10] : memref<1x128xf32, #tpu.memory_space<vmem>>, vector<1x128xf32>
    %10 = vector.broadcast %9 : vector<1x128xf32> to vector<8x128xf32>
    %11 = arith.mulf %8, %10 : vector<8x128xf32>
    %c0_11 = arith.constant 0 : index
    %c0_12 = arith.constant 0 : index
    %12 = vector.load %arg3[%c0_11, %c0_12] : memref<1x128xf32, #tpu.memory_space<vmem>>, vector<1x128xf32>
    %13 = vector.broadcast %12 : vector<1x128xf32> to vector<8x128xf32>
    %14 = arith.addf %11, %13 : vector<8x128xf32>
    %cst_13 = arith.constant 0.000000e+00 : f32
    %15 = vector.broadcast %cst_13 : f32 to vector<8x128xf32>
    %16 = arith.maximumf %14, %15 : vector<8x128xf32>
    %c1 = arith.constant 1 : index
    %c0_14 = arith.constant 0 : index
    %17 = vector.load %arg8[%c1, %c0_14] : memref<37x128xf32, #tpu.memory_space<vmem>>, vector<8x128xf32>
    tpu.vector_store %arg8[%c1, %c0_14], %16 {strides = array<i32>} : memref<37x128xf32, #tpu.memory_space<vmem>>, vector<8x128xf32>,
    %c1_15 = arith.constant 1 : index
    %c0_16 = arith.constant 0 : index
    %c0_17 = arith.constant 0 : index
    %18 = vector.load %arg1[%c1_15, %c0_16, %c0_17] : memref<4x8x128xf32, #tpu.memory_space<vmem>>, vector<1x8x128xf32>
    %19 = vector.shape_cast %18 : vector<1x8x128xf32> to vector<8x128xf32>
    %c0_18 = arith.constant 0 : index
    %c0_19 = arith.constant 0 : index
    %20 = vector.load %arg2[%c0_18, %c0_19] : memref<1x128xf32, #tpu.memory_space<vmem>>, vector<1x128xf32>
    %21 = vector.broadcast %20 : vector<1x128xf32> to vector<8x128xf32>
    %22 = arith.mulf %19, %21 : vector<8x128xf32>
    %c0_20 = arith.constant 0 : index
    %c0_21 = arith.constant 0 : index
    %23 = vector.load %arg3[%c0_20, %c0_21] : memref<1x128xf32, #tpu.memory_space<vmem>>, vector<1x128xf32>
    %24 = vector.broadcast %23 : vector<1x128xf32> to vector<8x128xf32>
    %25 = arith.addf %22, %24 : vector<8x128xf32>
    %cst_22 = arith.constant 0.000000e+00 : f32
    %26 = vector.broadcast %cst_22 : f32 to vector<8x128xf32>
    %27 = arith.maximumf %25, %26 : vector<8x128xf32>
    %c10 = arith.constant 10 : index
    %c0_23 = arith.constant 0 : index
    %28 = vector.load %arg8[%c10, %c0_23] : memref<37x128xf32, #tpu.memory_space<vmem>>, vector<8x128xf32>
    tpu.vector_store %arg8[%c10, %c0_23], %27 {strides = array<i32>} : memref<37x128xf32, #tpu.memory_space<vmem>>, vector<8x128xf32>,
    %c2 = arith.constant 2 : index
    %c0_24 = arith.constant 0 : index
    %c0_25 = arith.constant 0 : index
    %29 = vector.load %arg1[%c2, %c0_24, %c0_25] : memref<4x8x128xf32, #tpu.memory_space<vmem>>, vector<1x8x128xf32>
    %30 = vector.shape_cast %29 : vector<1x8x128xf32> to vector<8x128xf32>
    %c0_26 = arith.constant 0 : index
    %c0_27 = arith.constant 0 : index
    %31 = vector.load %arg2[%c0_26, %c0_27] : memref<1x128xf32, #tpu.memory_space<vmem>>, vector<1x128xf32>
    %32 = vector.broadcast %31 : vector<1x128xf32> to vector<8x128xf32>
    %33 = arith.mulf %30, %32 : vector<8x128xf32>
    %c0_28 = arith.constant 0 : index
    %c0_29 = arith.constant 0 : index
    %34 = vector.load %arg3[%c0_28, %c0_29] : memref<1x128xf32, #tpu.memory_space<vmem>>, vector<1x128xf32>
    %35 = vector.broadcast %34 : vector<1x128xf32> to vector<8x128xf32>
    %36 = arith.addf %33, %35 : vector<8x128xf32>
    %cst_30 = arith.constant 0.000000e+00 : f32
    %37 = vector.broadcast %cst_30 : f32 to vector<8x128xf32>
    %38 = arith.maximumf %36, %37 : vector<8x128xf32>
    %c19 = arith.constant 19 : index
    %c0_31 = arith.constant 0 : index
    %39 = vector.load %arg8[%c19, %c0_31] : memref<37x128xf32, #tpu.memory_space<vmem>>, vector<8x128xf32>
    tpu.vector_store %arg8[%c19, %c0_31], %38 {strides = array<i32>} : memref<37x128xf32, #tpu.memory_space<vmem>>, vector<8x128xf32>,
    %c3 = arith.constant 3 : index
    %c0_32 = arith.constant 0 : index
    %c0_33 = arith.constant 0 : index
    %40 = vector.load %arg1[%c3, %c0_32, %c0_33] : memref<4x8x128xf32, #tpu.memory_space<vmem>>, vector<1x8x128xf32>
    %41 = vector.shape_cast %40 : vector<1x8x128xf32> to vector<8x128xf32>
    %c0_34 = arith.constant 0 : index
    %c0_35 = arith.constant 0 : index
    %42 = vector.load %arg2[%c0_34, %c0_35] : memref<1x128xf32, #tpu.memory_space<vmem>>, vector<1x128xf32>
    %43 = vector.broadcast %42 : vector<1x128xf32> to vector<8x128xf32>
    %44 = arith.mulf %41, %43 : vector<8x128xf32>
    %c0_36 = arith.constant 0 : index
    %c0_37 = arith.constant 0 : index
    %45 = vector.load %arg3[%c0_36, %c0_37] : memref<1x128xf32, #tpu.memory_space<vmem>>, vector<1x128xf32>
    %46 = vector.broadcast %45 : vector<1x128xf32> to vector<8x128xf32>
    %47 = arith.addf %44, %46 : vector<8x128xf32>
    %cst_38 = arith.constant 0.000000e+00 : f32
    %48 = vector.broadcast %cst_38 : f32 to vector<8x128xf32>
    %49 = arith.maximumf %47, %48 : vector<8x128xf32>
    %c28 = arith.constant 28 : index
    %c0_39 = arith.constant 0 : index
    %50 = vector.load %arg8[%c28, %c0_39] : memref<37x128xf32, #tpu.memory_space<vmem>>, vector<8x128xf32>
    tpu.vector_store %arg8[%c28, %c0_39], %49 {strides = array<i32>} : memref<37x128xf32, #tpu.memory_space<vmem>>, vector<8x128xf32>,
    %c0_40 = arith.constant 0 : index
    %c0_41 = arith.constant 0 : index
    %51 = vector.load %arg8[%c0_40, %c0_41] : memref<37x128xf32, #tpu.memory_space<vmem>>, vector<35x128xf32>
    %52 = arith.truncf %51 : vector<35x128xf32> to vector<35x128xbf16>
    %c0_42 = arith.constant 0 : index
    %c0_43 = arith.constant 0 : index
    %c0_44 = arith.constant 0 : index
    %53 = vector.load %arg4[%c0_42, %c0_43, %c0_44] : memref<3x128x128xbf16, #tpu.memory_space<vmem>>, vector<1x128x128xbf16>
    %54 = vector.shape_cast %53 : vector<1x128x128xbf16> to vector<128x128xbf16>
    %cst_45 = arith.constant dense<0.000000e+00> : vector<35x128xf32>
    %55 = tpu.matmul %52, %54, %cst_45 {dimension_numbers = #tpu.dot_dimension_numbers<[1], [0], [0], [1], [0, 0, 1, 1], [], []>} : vector<35x128xbf16>, vector<128x128xbf16>, vector<35x128xf32> -> vector<35x128xf32>
    %c1_46 = arith.constant 1 : index
    %c0_47 = arith.constant 0 : index
    %56 = vector.load %arg8[%c1_46, %c0_47] : memref<37x128xf32, #tpu.memory_space<vmem>>, vector<35x128xf32>
    %57 = arith.truncf %56 : vector<35x128xf32> to vector<35x128xbf16>
    %c1_48 = arith.constant 1 : index
    %c0_49 = arith.constant 0 : index
    %c0_50 = arith.constant 0 : index
    %58 = vector.load %arg4[%c1_48, %c0_49, %c0_50] : memref<3x128x128xbf16, #tpu.memory_space<vmem>>, vector<1x128x128xbf16>
    %59 = vector.shape_cast %58 : vector<1x128x128xbf16> to vector<128x128xbf16>
    %cst_51 = arith.constant dense<0.000000e+00> : vector<35x128xf32>
    %60 = tpu.matmul %57, %59, %cst_51 {dimension_numbers = #tpu.dot_dimension_numbers<[1], [0], [0], [1], [0, 0, 1, 1], [], []>} : vector<35x128xbf16>, vector<128x128xbf16>, vector<35x128xf32> -> vector<35x128xf32>
    %61 = arith.addf %55, %60 : vector<35x128xf32>
    %c2_52 = arith.constant 2 : index
    %c0_53 = arith.constant 0 : index
    %62 = vector.load %arg8[%c2_52, %c0_53] : memref<37x128xf32, #tpu.memory_space<vmem>>, vector<35x128xf32>
    %63 = arith.truncf %62 : vector<35x128xf32> to vector<35x128xbf16>
    %c2_54 = arith.constant 2 : index
    %c0_55 = arith.constant 0 : index
    %c0_56 = arith.constant 0 : index
    %64 = vector.load %arg4[%c2_54, %c0_55, %c0_56] : memref<3x128x128xbf16, #tpu.memory_space<vmem>>, vector<1x128x128xbf16>
    %65 = vector.shape_cast %64 : vector<1x128x128xbf16> to vector<128x128xbf16>
    %cst_57 = arith.constant dense<0.000000e+00> : vector<35x128xf32>
    %66 = tpu.matmul %63, %65, %cst_57 {dimension_numbers = #tpu.dot_dimension_numbers<[1], [0], [0], [1], [0, 0, 1, 1], [], []>} : vector<35x128xbf16>, vector<128x128xbf16>, vector<35x128xf32> -> vector<35x128xf32>
    %67 = arith.addf %61, %66 : vector<35x128xf32>
    %c0_58 = arith.constant 0 : index
    %c0_59 = arith.constant 0 : index
    %68 = vector.load %arg5[%c0_58, %c0_59] : memref<1x128xf32, #tpu.memory_space<vmem>>, vector<1x128xf32>
    %69 = vector.broadcast %68 : vector<1x128xf32> to vector<35x128xf32>
    %70 = arith.addf %67, %69 : vector<35x128xf32>
    %cst_60 = arith.constant 0.000000e+00 : f32
    %71 = vector.broadcast %cst_60 : f32 to vector<35x128xf32>
    %72 = arith.maximumf %70, %71 : vector<35x128xf32>
    %c1_61 = arith.constant 1 : index
    %c0_62 = arith.constant 0 : index
    %73 = vector.load %arg9[%c1_61, %c0_62] : memref<37x128xf32, #tpu.memory_space<vmem>>, vector<35x128xf32>
    tpu.vector_store %arg9[%c1_61, %c0_62], %72 {strides = array<i32>} : memref<37x128xf32, #tpu.memory_space<vmem>>, vector<35x128xf32>,
    %c0_63 = arith.constant 0 : index
    %c0_64 = arith.constant 0 : index
    %74 = vector.load %arg9[%c0_63, %c0_64] : memref<37x128xf32, #tpu.memory_space<vmem>>, vector<1x128xf32>
    tpu.vector_store %arg9[%c0_63, %c0_64], %1 {strides = array<i32>} : memref<37x128xf32, #tpu.memory_space<vmem>>, vector<1x128xf32>,
    %c9_65 = arith.constant 9 : index
    %c0_66 = arith.constant 0 : index
    %75 = vector.load %arg9[%c9_65, %c0_66] : memref<37x128xf32, #tpu.memory_space<vmem>>, vector<1x128xf32>
    tpu.vector_store %arg9[%c9_65, %c0_66], %1 {strides = array<i32>} : memref<37x128xf32, #tpu.memory_space<vmem>>, vector<1x128xf32>,
    %c18_67 = arith.constant 18 : index
    %c0_68 = arith.constant 0 : index
    %76 = vector.load %arg9[%c18_67, %c0_68] : memref<37x128xf32, #tpu.memory_space<vmem>>, vector<1x128xf32>
    tpu.vector_store %arg9[%c18_67, %c0_68], %1 {strides = array<i32>} : memref<37x128xf32, #tpu.memory_space<vmem>>, vector<1x128xf32>,
    %c27_69 = arith.constant 27 : index
    %c0_70 = arith.constant 0 : index
    %77 = vector.load %arg9[%c27_69, %c0_70] : memref<37x128xf32, #tpu.memory_space<vmem>>, vector<1x128xf32>
    tpu.vector_store %arg9[%c27_69, %c0_70], %1 {strides = array<i32>} : memref<37x128xf32, #tpu.memory_space<vmem>>, vector<1x128xf32>,
    %c36_71 = arith.constant 36 : index
    %c0_72 = arith.constant 0 : index
    %78 = vector.load %arg9[%c36_71, %c0_72] : memref<37x128xf32, #tpu.memory_space<vmem>>, vector<1x128xf32>
    tpu.vector_store %arg9[%c36_71, %c0_72], %1 {strides = array<i32>} : memref<37x128xf32, #tpu.memory_space<vmem>>, vector<1x128xf32>,
    %c0_73 = arith.constant 0 : index
    %c0_74 = arith.constant 0 : index
    %79 = vector.load %arg9[%c0_73, %c0_74] : memref<37x128xf32, #tpu.memory_space<vmem>>, vector<35x128xf32>
    %80 = arith.truncf %79 : vector<35x128xf32> to vector<35x128xbf16>
    %c0_75 = arith.constant 0 : index
    %c0_76 = arith.constant 0 : index
    %c0_77 = arith.constant 0 : index
    %81 = vector.load %arg6[%c0_75, %c0_76, %c0_77] : memref<3x128x128xbf16, #tpu.memory_space<vmem>>, vector<1x128x128xbf16>
    %82 = vector.shape_cast %81 : vector<1x128x128xbf16> to vector<128x128xbf16>
    %cst_78 = arith.constant dense<0.000000e+00> : vector<35x128xf32>
    %83 = tpu.matmul %80, %82, %cst_78 {dimension_numbers = #tpu.dot_dimension_numbers<[1], [0], [0], [1], [0, 0, 1, 1], [], []>} : vector<35x128xbf16>, vector<128x128xbf16>, vector<35x128xf32> -> vector<35x128xf32>
    %c1_79 = arith.constant 1 : index
    %c0_80 = arith.constant 0 : index
    %84 = vector.load %arg9[%c1_79, %c0_80] : memref<37x128xf32, #tpu.memory_space<vmem>>, vector<35x128xf32>
    %85 = arith.truncf %84 : vector<35x128xf32> to vector<35x128xbf16>
    %c1_81 = arith.constant 1 : index
    %c0_82 = arith.constant 0 : index
    %c0_83 = arith.constant 0 : index
    %86 = vector.load %arg6[%c1_81, %c0_82, %c0_83] : memref<3x128x128xbf16, #tpu.memory_space<vmem>>, vector<1x128x128xbf16>
    %87 = vector.shape_cast %86 : vector<1x128x128xbf16> to vector<128x128xbf16>
    %cst_84 = arith.constant dense<0.000000e+00> : vector<35x128xf32>
    %88 = tpu.matmul %85, %87, %cst_84 {dimension_numbers = #tpu.dot_dimension_numbers<[1], [0], [0], [1], [0, 0, 1, 1], [], []>} : vector<35x128xbf16>, vector<128x128xbf16>, vector<35x128xf32> -> vector<35x128xf32>
    %89 = arith.addf %83, %88 : vector<35x128xf32>
    %c2_85 = arith.constant 2 : index
    %c0_86 = arith.constant 0 : index
    %90 = vector.load %arg9[%c2_85, %c0_86] : memref<37x128xf32, #tpu.memory_space<vmem>>, vector<35x128xf32>
    %91 = arith.truncf %90 : vector<35x128xf32> to vector<35x128xbf16>
    %c2_87 = arith.constant 2 : index
    %c0_88 = arith.constant 0 : index
    %c0_89 = arith.constant 0 : index
    %92 = vector.load %arg6[%c2_87, %c0_88, %c0_89] : memref<3x128x128xbf16, #tpu.memory_space<vmem>>, vector<1x128x128xbf16>
    %93 = vector.shape_cast %92 : vector<1x128x128xbf16> to vector<128x128xbf16>
    %cst_90 = arith.constant dense<0.000000e+00> : vector<35x128xf32>
    %94 = tpu.matmul %91, %93, %cst_90 {dimension_numbers = #tpu.dot_dimension_numbers<[1], [0], [0], [1], [0, 0, 1, 1], [], []>} : vector<35x128xbf16>, vector<128x128xbf16>, vector<35x128xf32> -> vector<35x128xf32>
    %95 = arith.addf %89, %94 : vector<35x128xf32>
    %96 = vector.extract_strided_slice %95 {offsets = [0, 0], sizes = [8, 128], strides = [1, 1]} : vector<35x128xf32> to vector<8x128xf32>
    %c0_91 = arith.constant 0 : index
    %c0_92 = arith.constant 0 : index
    %c0_93 = arith.constant 0 : index
    %97 = vector.load %arg1[%c0_91, %c0_92, %c0_93] : memref<4x8x128xf32, #tpu.memory_space<vmem>>, vector<1x8x128xf32>
    %98 = vector.shape_cast %97 : vector<1x8x128xf32> to vector<8x128xf32>
    %99 = arith.addf %96, %98 : vector<8x128xf32>
    %c0_94 = arith.constant 0 : index
    %c0_95 = arith.constant 0 : index
    %c0_96 = arith.constant 0 : index
    %100 = vector.load %arg7[%c0_94, %c0_95, %c0_96] : memref<4x8x128xf32, #tpu.memory_space<vmem>>, vector<1x8x128xf32>
    %101 = vector.shape_cast %100 : vector<1x8x128xf32> to vector<8x128xf32>
    %102 = vector.shape_cast %99 : vector<8x128xf32> to vector<1x8x128xf32>
    tpu.vector_store %arg7[%c0_94, %c0_95, %c0_96], %102 {strides = array<i32>} : memref<4x8x128xf32, #tpu.memory_space<vmem>>, vector<1x8x128xf32>,
    %103 = vector.extract_strided_slice %95 {offsets = [9, 0], sizes = [8, 128], strides = [1, 1]} : vector<35x128xf32> to vector<8x128xf32>
    %c1_97 = arith.constant 1 : index
    %c0_98 = arith.constant 0 : index
    %c0_99 = arith.constant 0 : index
    %104 = vector.load %arg1[%c1_97, %c0_98, %c0_99] : memref<4x8x128xf32, #tpu.memory_space<vmem>>, vector<1x8x128xf32>
    %105 = vector.shape_cast %104 : vector<1x8x128xf32> to vector<8x128xf32>
    %106 = arith.addf %103, %105 : vector<8x128xf32>
    %c1_100 = arith.constant 1 : index
    %c0_101 = arith.constant 0 : index
    %c0_102 = arith.constant 0 : index
    %107 = vector.load %arg7[%c1_100, %c0_101, %c0_102] : memref<4x8x128xf32, #tpu.memory_space<vmem>>, vector<1x8x128xf32>
    %108 = vector.shape_cast %107 : vector<1x8x128xf32> to vector<8x128xf32>
    %109 = vector.shape_cast %106 : vector<8x128xf32> to vector<1x8x128xf32>
    tpu.vector_store %arg7[%c1_100, %c0_101, %c0_102], %109 {strides = array<i32>} : memref<4x8x128xf32, #tpu.memory_space<vmem>>, vector<1x8x128xf32>,
    %110 = vector.extract_strided_slice %95 {offsets = [18, 0], sizes = [8, 128], strides = [1, 1]} : vector<35x128xf32> to vector<8x128xf32>
    %c2_103 = arith.constant 2 : index
    %c0_104 = arith.constant 0 : index
    %c0_105 = arith.constant 0 : index
    %111 = vector.load %arg1[%c2_103, %c0_104, %c0_105] : memref<4x8x128xf32, #tpu.memory_space<vmem>>, vector<1x8x128xf32>
    %112 = vector.shape_cast %111 : vector<1x8x128xf32> to vector<8x128xf32>
    %113 = arith.addf %110, %112 : vector<8x128xf32>
    %c2_106 = arith.constant 2 : index
    %c0_107 = arith.constant 0 : index
    %c0_108 = arith.constant 0 : index
    %114 = vector.load %arg7[%c2_106, %c0_107, %c0_108] : memref<4x8x128xf32, #tpu.memory_space<vmem>>, vector<1x8x128xf32>
    %115 = vector.shape_cast %114 : vector<1x8x128xf32> to vector<8x128xf32>
    %116 = vector.shape_cast %113 : vector<8x128xf32> to vector<1x8x128xf32>
    tpu.vector_store %arg7[%c2_106, %c0_107, %c0_108], %116 {strides = array<i32>} : memref<4x8x128xf32, #tpu.memory_space<vmem>>, vector<1x8x128xf32>,
    %117 = vector.extract_strided_slice %95 {offsets = [27, 0], sizes = [8, 128], strides = [1, 1]} : vector<35x128xf32> to vector<8x128xf32>
    %c3_109 = arith.constant 3 : index
    %c0_110 = arith.constant 0 : index
    %c0_111 = arith.constant 0 : index
    %118 = vector.load %arg1[%c3_109, %c0_110, %c0_111] : memref<4x8x128xf32, #tpu.memory_space<vmem>>, vector<1x8x128xf32>
    %119 = vector.shape_cast %118 : vector<1x8x128xf32> to vector<8x128xf32>
    %120 = arith.addf %117, %119 : vector<8x128xf32>
    %c3_112 = arith.constant 3 : index
    %c0_113 = arith.constant 0 : index
    %c0_114 = arith.constant 0 : index
    %121 = vector.load %arg7[%c3_112, %c0_113, %c0_114] : memref<4x8x128xf32, #tpu.memory_space<vmem>>, vector<1x8x128xf32>
    %122 = vector.shape_cast %121 : vector<1x8x128xf32> to vector<8x128xf32>
    %123 = vector.shape_cast %120 : vector<8x128xf32> to vector<1x8x128xf32>
    tpu.vector_store %arg7[%c3_112, %c0_113, %c0_114], %123 {strides = array<i32>} : memref<4x8x128xf32, #tpu.memory_space<vmem>>, vector<1x8x128xf32>,
    return
  }
  func.func @transform_0(%arg0: i32) -> (i32, i32, i32) {
    %c0_i32 = arith.constant 0 : i32
    %c0_i32_0 = arith.constant 0 : i32
    %c0_i32_1 = arith.constant 0 : i32
    return %arg0, %c0_i32, %c0_i32_0 : i32, i32, i32
  }
  func.func @transform_1(%arg0: i32) -> (i32, i32) {
    %c0_i32 = arith.constant 0 : i32
    %c0_i32_0 = arith.constant 0 : i32
    %c0_i32_1 = arith.constant 0 : i32
    return %c0_i32, %c0_i32_0 : i32, i32
  }
  func.func @transform_2(%arg0: i32) -> (i32, i32) {
    %c0_i32 = arith.constant 0 : i32
    %c0_i32_0 = arith.constant 0 : i32
    %c0_i32_1 = arith.constant 0 : i32
    return %c0_i32, %c0_i32_0 : i32, i32
  }
  func.func @transform_3(%arg0: i32) -> (i32, i32, i32) {
    %c0_i32 = arith.constant 0 : i32
    %c0_i32_0 = arith.constant 0 : i32
    %c0_i32_1 = arith.constant 0 : i32
    %c0_i32_2 = arith.constant 0 : i32
    return %c0_i32, %c0_i32_0, %c0_i32_1 : i32, i32, i32
  }
  func.func @transform_4(%arg0: i32) -> (i32, i32) {
    %c0_i32 = arith.constant 0 : i32
    %c0_i32_0 = arith.constant 0 : i32
    %c0_i32_1 = arith.constant 0 : i32
    return %c0_i32, %c0_i32_0 : i32, i32
  }
  func.func @transform_5(%arg0: i32) -> (i32, i32, i32) {
    %c0_i32 = arith.constant 0 : i32
    %c0_i32_0 = arith.constant 0 : i32
    %c0_i32_1 = arith.constant 0 : i32
    %c0_i32_2 = arith.constant 0 : i32
    return %c0_i32, %c0_i32_0, %c0_i32_1 : i32, i32, i32
  }
  func.func @transform_6(%arg0: i32) -> (i32, i32, i32) {
    %c0_i32 = arith.constant 0 : i32
    %c0_i32_0 = arith.constant 0 : i32
    %c0_i32_1 = arith.constant 0 : i32
    return %arg0, %c0_i32, %c0_i32_0 : i32, i32, i32
  }
}

</mosaic_0001>

<llo_original>
// kernel: tpu_custom_call.1
$region0: #{tpu_custom_call.1}
  #allocation0 [shape = 'u32[]', space=smem, size = 0x4, offset = 0x4, fixed_abs, tag = 'smem constant byte address 0x4 - core index']
  #allocation1 [shape = 'u32[72,128]{1,0:T(1,128)}', space=vmem, size = 0x9000, scoped, tag = 'internal scratch']
  #allocation2 [shape = 'f32[37,128]{1,0:T(8,128)}', space=vmem, size = 0x5000, scoped, tag = 'scratch operand']
  #allocation3 [shape = 'f32[37,128]{1,0:T(8,128)}', space=vmem, size = 0x5000, scoped, tag = 'scratch operand']
  %s0 = inlined_call_operand.hbm [shape: f32[8,8,128], index: 0, kind: input, shape index: {}]
  %s1 = inlined_call_operand.hbm [shape: f32[1,128], index: 1, kind: input, shape index: {}]
  %s2 = inlined_call_operand.vmem [shape: f32[1,128], index: 2, kind: input, shape index: {}]
  %s3 = inlined_call_operand.hbm [shape: bf16[3,128,128], index: 3, kind: input, shape index: {}]
  %s4 = inlined_call_operand.vmem [shape: f32[1,128], index: 4, kind: input, shape index: {}]
  %s5 = inlined_call_operand.hbm [shape: bf16[3,128,128], index: 5, kind: input, shape index: {}]
  %s6 = inlined_call_operand.hbm [shape: f32[8,8,128], index: 6, kind: output, shape index: {}]
  %s7 = sld [smem:[#allocation0]]
  $region73: #{tpu_custom_call.1} parent=0
    _
  %s9 = ssub.s32 1, %s7
  %s10 = scalar_select 0, %s9, %s7
  $region1: #{tpu_custom_call.1} parent=0
    #allocation4 [shape = 'u8[32768]{0}', space=vmem, size = 0x8000, scoped, tag = 'input window, operand 0']
    #allocation5 [shape = 's32[2]{0}', space=sflag, size = 0x8, scoped, tag = 'scoped memory for tpu_custom_call.1']
    #allocation6 [shape = 's32[2]{0}', space=sflag, size = 0x8, scoped, tag = 'scoped memory for tpu_custom_call.1']
    #allocation7 [shape = 'u8[512]{0}', space=vmem, size = 0x400, scoped, tag = 'input window, operand 1, single buffered']
    #allocation8 [shape = 's32[1]{0}', space=sflag, size = 0x4, scoped, tag = 'scoped memory for tpu_custom_call.1']
    #allocation9 [shape = 'u8[98304]{0}', space=vmem, size = 0x18000, scoped, tag = 'input window, operand 3, single buffered']
    #allocation10 [shape = 'u8[98304]{0}', space=vmem, size = 0x18000, scoped, tag = 'input window, operand 5, single buffered']
    #allocation11 [shape = 's32[1]{0}', space=sflag, size = 0x4, scoped, tag = 'scoped memory for tpu_custom_call.1']
    #allocation12 [shape = 'u8[32768]{0}', space=vmem, size = 0x8000, scoped, tag = 'output window, operand 0']
    %11 = vsyncpa [#allocation5], 0
    %s12 = scalar_lea.sflag [#allocation5], 1
    %13 = vsyncpa %s12, 0
    %14 = vsyncpa [#allocation8], 0
    %15 = vsyncpa [#allocation11], 0
    %16 = vsyncpa [#allocation6], 0
    %s17 = scalar_lea.sflag [#allocation6], 1
    %18 = vsyncpa %s17, 0
    loop: start=0, step=1, limit=4
    $region2: #{tpu_custom_call.1} parent=1 // loop_pre_header
      _
    $region3: #{tpu_custom_call.1} parent=1 // loop_header
      %s20 = sphi 0, %s24
      %p21 = scmp.ge.s32.totalorder %s20, 4
      %s30 = sphi 0, %s32
      %s33 = sphi 0, %s30
      %s34 = sphi 0, %s33
      %s50 = sphi 0, %s34
      %s54 = sphi 0, %s54
      %s56 = sphi 0, %s54
      %s57 = sphi 0, %s56
      %s71 = sphi 0, %s57
      %s75 = sphi 0, %s75
      %s77 = sphi 0, %s75
      %s78 = sphi 0, %s77
      %s92 = sphi 0, %s78
      %s96 = sphi 0, %s96
      %s98 = sphi 0, %s96
      %s99 = sphi 0, %s98
      %s113 = sphi 0, %s99
      %s117 = sphi 0, %s117
      %s119 = sphi 0, %s117
      %s120 = sphi 0, %s119
      %s134 = sphi 0, %s120
      %s138 = sphi 0, %s138
      %s140 = sphi 0, %s138
      %s141 = sphi 0, %s140
      %s155 = sphi 0, %s141
      %s161 = sphi 0, %s163
      %s164 = sphi 0, %s161
      %s165 = sphi 0, %s164
      %s181 = sphi 0, %s165
    $region4: #{tpu_custom_call.1} parent=1 // loop_header_branch
      %23 = sbr.rel (%p21) target = $region8
    $region5: #{tpu_custom_call.1} parent=1 // loop_body
      %s25 = ssub.s32 %s20, 1
      %s26 = ssub.s32 %s20, 2
      %s27 = sadd.s32 %s20, 1
      %s28 = ssub.s32 %s20, %s27
      %p29 = scmp.eq.s32.totalorder %s28, 0
      %s31 = sadd.s32 %s30, 1
      %s32 = scalar_select %p29, %s30, %s31
      %p35 = pneg %p29
      %p36 = scmp.eq.s32.totalorder %s20, 1
      %p37 = por %p35, %p36
      %p38 = scmp.ne.s32.totalorder %s30, %s33
      %p39 = scmp.eq.s32.totalorder %s20, 0
      %p40 = por %p38, %p39
      %p41 = scmp.ne.s32.totalorder %s30, %s33
      %p42 = scmp.eq.s32.totalorder %s25, 1
      %p43 = por %p41, %p42
      %p44 = scmp.ne.s32.totalorder %s33, %s34
      %p45 = scmp.eq.s32.totalorder %s25, 0
      %p46 = por %p44, %p45
      %p47 = scmp.ne.s32.totalorder %s33, %s34
      %p48 = scmp.eq.s32.totalorder %s26, 1
      %p49 = por %p47, %p48
      %p51 = scmp.ne.s32.totalorder %s34, %s50
      %p52 = scmp.eq.s32.totalorder %s26, 0
      %p53 = por %p51, %p52
      %s55 = sadd.s32 %s54, 1
      %p58 = scmp.eq.s32.totalorder %s20, 1
      %p59 = scmp.ne.s32.totalorder %s54, %s56
      %p60 = scmp.eq.s32.totalorder %s20, 0
      %p61 = por %p59, %p60
      %p62 = scmp.ne.s32.totalorder %s54, %s56
      %p63 = scmp.eq.s32.totalorder %s25, 1
      %p64 = por %p62, %p63
      %p65 = scmp.ne.s32.totalorder %s56, %s57
      %p66 = scmp.eq.s32.totalorder %s25, 0
      %p67 = por %p65, %p66
      %p68 = scmp.ne.s32.totalorder %s56, %s57
      %p69 = scmp.eq.s32.totalorder %s26, 1
      %p70 = por %p68, %p69
      %p72 = scmp.ne.s32.totalorder %s57, %s71
      %p73 = scmp.eq.s32.totalorder %s26, 0
      %p74 = por %p72, %p73
      %s76 = sadd.s32 %s75, 1
      %p79 = scmp.eq.s32.totalorder %s20, 1
      %p80 = scmp.ne.s32.totalorder %s75, %s77
      %p81 = scmp.eq.s32.totalorder %s20, 0
      %p82 = por %p80, %p81
      %p83 = scmp.ne.s32.totalorder %s75, %s77
      %p84 = scmp.eq.s32.totalorder %s25, 1
      %p85 = por %p83, %p84
      %p86 = scmp.ne.s32.totalorder %s77, %s78
      %p87 = scmp.eq.s32.totalorder %s25, 0
      %p88 = por %p86, %p87
      %p89 = scmp.ne.s32.totalorder %s77, %s78
      %p90 = scmp.eq.s32.totalorder %s26, 1
      %p91 = por %p89, %p90
      %p93 = scmp.ne.s32.totalorder %s78, %s92
      %p94 = scmp.eq.s32.totalorder %s26, 0
      %p95 = por %p93, %p94
      %s97 = sadd.s32 %s96, 1
      %p100 = scmp.eq.s32.totalorder %s20, 1
      %p101 = scmp.ne.s32.totalorder %s96, %s98
      %p102 = scmp.eq.s32.totalorder %s20, 0
      %p103 = por %p101, %p102
      %p104 = scmp.ne.s32.totalorder %s96, %s98
      %p105 = scmp.eq.s32.totalorder %s25, 1
      %p106 = por %p104, %p105
      %p107 = scmp.ne.s32.totalorder %s98, %s99
      %p108 = scmp.eq.s32.totalorder %s25, 0
      %p109 = por %p107, %p108
      %p110 = scmp.ne.s32.totalorder %s98, %s99
      %p111 = scmp.eq.s32.totalorder %s26, 1
      %p112 = por %p110, %p111
      %p114 = scmp.ne.s32.totalorder %s99, %s113
      %p115 = scmp.eq.s32.totalorder %s26, 0
      %p116 = por %p114, %p115
      %s118 = sadd.s32 %s117, 1
      %p121 = scmp.eq.s32.totalorder %s20, 1
      %p122 = scmp.ne.s32.totalorder %s117, %s119
      %p123 = scmp.eq.s32.totalorder %s20, 0
      %p124 = por %p122, %p123
      %p125 = scmp.ne.s32.totalorder %s117, %s119
      %p126 = scmp.eq.s32.totalorder %s25, 1
      %p127 = por %p125, %p126
      %p128 = scmp.ne.s32.totalorder %s119, %s120
      %p129 = scmp.eq.s32.totalorder %s25, 0
      %p130 = por %p128, %p129
      %p131 = scmp.ne.s32.totalorder %s119, %s120
      %p132 = scmp.eq.s32.totalorder %s26, 1
      %p133 = por %p131, %p132
      %p135 = scmp.ne.s32.totalorder %s120, %s134
      %p136 = scmp.eq.s32.totalorder %s26, 0
      %p137 = por %p135, %p136
      %s139 = sadd.s32 %s138, 1
      %p142 = scmp.eq.s32.totalorder %s20, 1
      %p143 = scmp.ne.s32.totalorder %s138, %s140
      %p144 = scmp.eq.s32.totalorder %s20, 0
      %p145 = por %p143, %p144
      %p146 = scmp.ne.s32.totalorder %s138, %s140
      %p147 = scmp.eq.s32.totalorder %s25, 1
      %p148 = por %p146, %p147
      %p149 = scmp.ne.s32.totalorder %s140, %s141
      %p150 = scmp.eq.s32.totalorder %s25, 0
      %p151 = por %p149, %p150
      %p152 = scmp.ne.s32.totalorder %s140, %s141
      %p153 = scmp.eq.s32.totalorder %s26, 1
      %p154 = por %p152, %p153
      %p156 = scmp.ne.s32.totalorder %s141, %s155
      %p157 = scmp.eq.s32.totalorder %s26, 0
      %p158 = por %p156, %p157
      %s159 = ssub.s32 %s20, %s27
      %p160 = scmp.eq.s32.totalorder %s159, 0
      %s162 = sadd.s32 %s161, 1
      %s163 = scalar_select %p160, %s161, %s162
      %p166 = pneg %p160
      %p167 = scmp.eq.s32.totalorder %s20, 1
      %p168 = por %p166, %p167
      %p169 = scmp.ne.s32.totalorder %s161, %s164
      %p170 = scmp.eq.s32.totalorder %s20, 0
      %p171 = por %p169, %p170
      %p172 = scmp.ne.s32.totalorder %s161, %s164
      %p173 = scmp.eq.s32.totalorder %s25, 1
      %p174 = por %p172, %p173
      %p175 = scmp.ne.s32.totalorder %s164, %s165
      %p176 = scmp.eq.s32.totalorder %s25, 0
      %p177 = por %p175, %p176
      %p178 = scmp.ne.s32.totalorder %s164, %s165
      %p179 = scmp.eq.s32.totalorder %s26, 1
      %p180 = por %p178, %p179
      %p182 = scmp.ne.s32.totalorder %s165, %s181
      %p183 = scmp.eq.s32.totalorder %s26, 0
      %p184 = por %p182, %p183
      %p185 = scmp.le.s32.totalorder 1, %s20
      %p186 = scmp.lt.s32.totalorder %s20, 3
      %p187 = pnand %p185, %p186
      %p188 = pneg %p187
      // Predicated region
      $region9: #{tpu_custom_call.1} parent=5 // pred_check
        _
      $region10: #{tpu_custom_call.1} parent=5 // pred_check_branch
        %190 = sbr.rel (%p187) target = $region12
      $region11: #{tpu_custom_call.1} parent=5 // pred_region
        %s191 = ssub.s32 %s20, 1
        // Predicated region
        $region13: #{tpu_custom_call.1} parent=11 // pred_check
          %p192 = pneg %p67
        $region14: #{tpu_custom_call.1} parent=11 // pred_check_branch
          %194 = sbr.rel (%p192) target = $region16
        $region15: #{tpu_custom_call.1} parent=11 // pred_region
          %196 = vsyncadd [#allocation8], 0
          %s198 = sshll.u32 %s1, 4
          %s199 = int_to_ptr.hbm [resolvable:$true] %s198
          %s200 = sshll.u32 [#allocation7], 4
          %s201 = int_to_ptr.vmem [resolvable:$true] %s200
          %203 = dma.hbm_to_vmem [thread:$0]  %s199, 16, %s201, [#allocation8]
        $region16: #{tpu_custom_call.1} parent=11 // pred_fallthru
          _
        // Predicated region
        $region17: #{tpu_custom_call.1} parent=11 // pred_check
          %p204 = pneg %p88
        $region18: #{tpu_custom_call.1} parent=11 // pred_check_branch
          %206 = sbr.rel (%p204) target = $region20
        $region19: #{tpu_custom_call.1} parent=11 // pred_region
          _
        $region20: #{tpu_custom_call.1} parent=11 // pred_fallthru
          _
        // Predicated region
        $region21: #{tpu_custom_call.1} parent=11 // pred_check
          %p207 = pneg %p109
        $region22: #{tpu_custom_call.1} parent=11 // pred_check_branch
          %209 = sbr.rel (%p207) target = $region24
        $region23: #{tpu_custom_call.1} parent=11 // pred_region
          %211 = vsyncadd [#allocation8], 0
          %s212 = sshll.u32 %s3, 4
          %s213 = int_to_ptr.hbm [resolvable:$true] %s212
          %s214 = sshll.u32 [#allocation9], 4
          %s215 = int_to_ptr.vmem [resolvable:$true] %s214
          %220 = dma.hbm_to_vmem [thread:$0]  %s213, 3072, %s215, [#allocation8], 64, 64, 4
        $region24: #{tpu_custom_call.1} parent=11 // pred_fallthru
          _
        // Predicated region
        $region25: #{tpu_custom_call.1} parent=11 // pred_check
          %p221 = pneg %p130
        $region26: #{tpu_custom_call.1} parent=11 // pred_check_branch
          %223 = sbr.rel (%p221) target = $region28
        $region27: #{tpu_custom_call.1} parent=11 // pred_region
          _
        $region28: #{tpu_custom_call.1} parent=11 // pred_fallthru
          _
        // Predicated region
        $region29: #{tpu_custom_call.1} parent=11 // pred_check
          %p224 = pneg %p151
        $region30: #{tpu_custom_call.1} parent=11 // pred_check_branch
          %226 = sbr.rel (%p224) target = $region32
        $region31: #{tpu_custom_call.1} parent=11 // pred_region
          %228 = vsyncadd [#allocation11], 0
          %s229 = sshll.u32 %s5, 4
          %s230 = int_to_ptr.hbm [resolvable:$true] %s229
          %s231 = sshll.u32 [#allocation10], 4
          %s232 = int_to_ptr.vmem [resolvable:$true] %s231
          %237 = dma.hbm_to_vmem [thread:$0]  %s230, 3072, %s232, [#allocation11], 64, 64, 4
        $region32: #{tpu_custom_call.1} parent=11 // pred_fallthru
          _
      $region12: #{tpu_custom_call.1} parent=5 // pred_fallthru
        _
      %p238 = scmp.lt.s32.totalorder %s20, 2
      // Predicated region
      $region33: #{tpu_custom_call.1} parent=5 // pred_check
        %p239 = pneg %p238
      $region34: #{tpu_custom_call.1} parent=5 // pred_check_branch
        %241 = sbr.rel (%p239) target = $region36
      $region35: #{tpu_custom_call.1} parent=5 // pred_region
        // Predicated region
        $region37: #{tpu_custom_call.1} parent=35 // pred_check
          %p242 = pneg %p40
        $region38: #{tpu_custom_call.1} parent=35 // pred_check_branch
          %244 = sbr.rel (%p242) target = $region40
        $region39: #{tpu_custom_call.1} parent=35 // pred_region
          %s245 = sand.u32 %s30, 1
          %s246 = scalar_lea.sflag [#allocation5], %s245
          %s247 = sand.u32 %s30, 1
          %s248 = smul.addr %s247, 32
          %s249 = scalar_lea.vmem [#allocation4], %s248
          %s250 = smul.u32 4, %s20
          %252 = vsyncadd %s246, 0
          %s253 = smul.addr %s250, 8
          %s254 = scalar_lea.hbm %s0, %s253
          %s255 = sshll.u32 %s254, 4
          %s256 = int_to_ptr.hbm [resolvable:$true] %s255
          %s257 = sshll.u32 %s249, 4
          %s258 = int_to_ptr.vmem [resolvable:$true] %s257
          %263 = dma.hbm_to_vmem [thread:$0]  %s256, 512, %s258, %s246, 128, 128, 8
        $region40: #{tpu_custom_call.1} parent=35 // pred_fallthru
          _
      $region36: #{tpu_custom_call.1} parent=5 // pred_fallthru
        _
      %p264 = scmp.le.s32.totalorder 1, %s20
      %p265 = scmp.lt.s32.totalorder %s20, 3
      %p266 = pnand %p264, %p265
      %p267 = pneg %p266
      // Predicated region
      $region41: #{tpu_custom_call.1} parent=5 // pred_check
        _
      $region42: #{tpu_custom_call.1} parent=5 // pred_check_branch
        %269 = sbr.rel (%p266) target = $region44
      $region43: #{tpu_custom_call.1} parent=5 // pred_region
        %s270 = ssub.s32 %s20, 1
        %s271 = sand.u32 %s33, 1
        %s272 = scalar_lea.sflag [#allocation5], %s271
        %s273 = sand.u32 %s33, 1
        %s274 = smul.addr %s273, 32
        %s275 = scalar_lea.vmem [#allocation4], %s274
        // Predicated region
        $region45: #{tpu_custom_call.1} parent=43 // pred_check
          %p276 = pneg %p46
        $region46: #{tpu_custom_call.1} parent=43 // pred_check_branch
          %278 = sbr.rel (%p276) target = $region48
        $region47: #{tpu_custom_call.1} parent=43 // pred_region
          %280 = dma.done %s272, 512
        $region48: #{tpu_custom_call.1} parent=43 // pred_fallthru
          _
        // Predicated region
        $region49: #{tpu_custom_call.1} parent=43 // pred_check
          %p281 = pneg %p67
        $region50: #{tpu_custom_call.1} parent=43 // pred_check_branch
          %283 = sbr.rel (%p281) target = $region52
        $region51: #{tpu_custom_call.1} parent=43 // pred_region
          %285 = dma.done [#allocation8], 16
        $region52: #{tpu_custom_call.1} parent=43 // pred_fallthru
          _
        // Predicated region
        $region53: #{tpu_custom_call.1} parent=43 // pred_check
          %p286 = pneg %p109
        $region54: #{tpu_custom_call.1} parent=43 // pred_check_branch
          %288 = sbr.rel (%p286) target = $region56
        $region55: #{tpu_custom_call.1} parent=43 // pred_region
          %290 = dma.done [#allocation8], 3072
        $region56: #{tpu_custom_call.1} parent=43 // pred_fallthru
          _
        // Predicated region
        $region57: #{tpu_custom_call.1} parent=43 // pred_check
          %p291 = pneg %p151
        $region58: #{tpu_custom_call.1} parent=43 // pred_check_branch
          %293 = sbr.rel (%p291) target = $region60
        $region59: #{tpu_custom_call.1} parent=43 // pred_region
          %295 = dma.done [#allocation11], 3072
        $region60: #{tpu_custom_call.1} parent=43 // pred_fallthru
          _
        %s296 = sand.u32 %s33, 1
        %s297 = scalar_lea.sflag [#allocation5], %s296
        %s298 = sand.u32 %s33, 1
        %s299 = smul.addr %s298, 32
        %s300 = scalar_lea.vmem [#allocation4], %s299
        %p301 = pneg %p46
        %p302 = pneg %p43
        %p303 = pneg %p67
        %p304 = pneg %p64
        %p305 = pneg %p88
        %p306 = pneg %p85
        %p307 = pneg %p109
        %p308 = pneg %p106
        %p309 = pneg %p130
        %p310 = pneg %p127
        %p311 = pneg %p151
        %p312 = pneg %p148
        %p313 = pneg %p177
        %p314 = pneg %p174
        %s315 = sand.u32 %s164, 1
        %s316 = scalar_lea.sflag [#allocation6], %s315
        %s317 = sand.u32 %s164, 1
        %s318 = smul.addr %s317, 32
        %s319 = scalar_lea.vmem [#allocation12], %s318
        %s320 = smul.u32 4, %s25
        %s321 = smul.u32 4, %s25
        %322 = vst [vmem:[#allocation2] sm:$0x1] 0.0
        %323 = vst [vmem:[#allocation2 + $0x9] sm:$0x1] 0.0
        %324 = vst [vmem:[#allocation2 + $0x12] sm:$0x1] 0.0
        %325 = vst [vmem:[#allocation2 + $0x1b] sm:$0x1] 0.0
        %326 = vst [vmem:[#allocation2 + $0x24] sm:$0x1] 0.0
        %v327 = vld [vmem:[%s275] sm:$0xff]
        %v328 = vld [vmem:[#allocation7] sm:$0x1]
        %v330 = vperm.slane %v328, 0
        %v332 = vmul.f32 %v327, %v330
        %v333 = vld [vmem:[%s2] sm:$0x1]
        %v335 = vperm.slane %v333, 0
        %v337 = vadd.f32 %v332, %v335
        %v338 = vmax.f32 %v337, 0.0
        %339 = vst [vmem:[#allocation2 + $0x1] sm:$0xff] %v338
        %s340 = scalar_lea.vmem %s275, 8 [#allocation4]
        %v341 = vld [vmem:[%s340] sm:$0xff]
        %v342 = vld [vmem:[#allocation7] sm:$0x1]
        %v344 = vperm.slane %v342, 0
        %v346 = vmul.f32 %v341, %v344
        %v347 = vld [vmem:[%s2] sm:$0x1]
        %v349 = vperm.slane %v347, 0
        %v351 = vadd.f32 %v346, %v349
        %v352 = vmax.f32 %v351, 0.0
        %353 = vst [vmem:[#allocation2 + $0xa] sm:$0xff] %v352
        %s354 = scalar_lea.vmem %s275, 16 [#allocation4]
        %v355 = vld [vmem:[%s354] sm:$0xff]
        %v356 = vld [vmem:[#allocation7] sm:$0x1]
        %v358 = vperm.slane %v356, 0
        %v360 = vmul.f32 %v355, %v358
        %v361 = vld [vmem:[%s2] sm:$0x1]
        %v363 = vperm.slane %v361, 0
        %v365 = vadd.f32 %v360, %v363
        %v366 = vmax.f32 %v365, 0.0
        %367 = vst [vmem:[#allocation2 + $0x13] sm:$0xff] %v366
        %s368 = scalar_lea.vmem %s275, 24 [#allocation4]
        %v369 = vld [vmem:[%s368] sm:$0xff]
        %v370 = vld [vmem:[#allocation7] sm:$0x1]
        %v372 = vperm.slane %v370, 0
        %v374 = vmul.f32 %v369, %v372
        %v375 = vld [vmem:[%s2] sm:$0x1]
        %v377 = vperm.slane %v375, 0
        %v379 = vadd.f32 %v374, %v377
        %v380 = vmax.f32 %v379, 0.0
        %381 = vst [vmem:[#allocation2 + $0x1c] sm:$0xff] %v380
        %v382 = vld [vmem:[#allocation2] sm:$0xff]
        %v383 = vld [vmem:[#allocation2 + $0x8] sm:$0xff]
        %v384 = vld [vmem:[#allocation2 + $0x10] sm:$0xff]
        %v385 = vld [vmem:[#allocation2 + $0x18] sm:$0xff]
        %v386 = vld [vmem:[#allocation2 + $0x20] sm:$0x7]
        %v387 = vpack.c.bf16 %v383, %v382
        %v388 = vpack.c.bf16 %v385, %v384
        %v389 = vpack.c.bf16 %v386, %v386
        %v390 = vld [vmem:[#allocation9] sm:$0xf]
        %v391 = vld [vmem:[#allocation9 + $0x4] sm:$0xf]
        %v392 = vld [vmem:[#allocation9 + $0x8] sm:$0xf]
        %v393 = vld [vmem:[#allocation9 + $0xc] sm:$0xf]
        %v394 = vld [vmem:[#allocation9 + $0x10] sm:$0xf]
        %v395 = vld [vmem:[#allocation9 + $0x14] sm:$0xf]
        %v396 = vld [vmem:[#allocation9 + $0x18] sm:$0xf]
        %v397 = vld [vmem:[#allocation9 + $0x1c] sm:$0xf]
        %v398 = vld [vmem:[#allocation9 + $0x20] sm:$0xf]
        %v399 = vld [vmem:[#allocation9 + $0x24] sm:$0xf]
        %v400 = vld [vmem:[#allocation9 + $0x28] sm:$0xf]
        %v401 = vld [vmem:[#allocation9 + $0x2c] sm:$0xf]
        %v402 = vld [vmem:[#allocation9 + $0x30] sm:$0xf]
        %v403 = vld [vmem:[#allocation9 + $0x34] sm:$0xf]
        %v404 = vld [vmem:[#allocation9 + $0x38] sm:$0xf]
        %v405 = vld [vmem:[#allocation9 + $0x3c] sm:$0xf]
        %v406 = vld [vmem:[#allocation2 + $0x1] sm:$0xff]
        %v407 = vld [vmem:[#allocation2 + $0x9] sm:$0xff]
        %v408 = vld [vmem:[#allocation2 + $0x11] sm:$0xff]
        %v409 = vld [vmem:[#allocation2 + $0x19] sm:$0xff]
        %v410 = vld [vmem:[#allocation2 + $0x21] sm:$0x7]
        %v411 = vpack.c.bf16 %v407, %v406
        %v412 = vpack.c.bf16 %v409, %v408
        %v413 = vpack.c.bf16 %v410, %v410
        %s414 = scalar_lea.vmem [#allocation9], 64
        %v415 = vld [vmem:[%s414] sm:$0xf]
        %v416 = vld [vmem:[%s414 + $0x4] sm:$0xf]
        %v417 = vld [vmem:[%s414 + $0x8] sm:$0xf]
        %v418 = vld [vmem:[%s414 + $0xc] sm:$0xf]
        %v419 = vld [vmem:[%s414 + $0x10] sm:$0xf]
        %v420 = vld [vmem:[%s414 + $0x14] sm:$0xf]
        %v421 = vld [vmem:[%s414 + $0x18] sm:$0xf]
        %v422 = vld [vmem:[%s414 + $0x1c] sm:$0xf]
        %v423 = vld [vmem:[%s414 + $0x20] sm:$0xf]
        %v424 = vld [vmem:[%s414 + $0x24] sm:$0xf]
        %v425 = vld [vmem:[%s414 + $0x28] sm:$0xf]
        %v426 = vld [vmem:[%s414 + $0x2c] sm:$0xf]
        %v427 = vld [vmem:[%s414 + $0x30] sm:$0xf]
        %v428 = vld [vmem:[%s414 + $0x34] sm:$0xf]
        %v429 = vld [vmem:[%s414 + $0x38] sm:$0xf]
        %v430 = vld [vmem:[%s414 + $0x3c] sm:$0xf]
        %v447 = vunpack.c.l.b16 %v415
        %v448 = vunpack.c.l.b16 %v416
        %v449 = vunpack.c.l.b16 %v417
        %v450 = vunpack.c.l.b16 %v418
        %v451 = vunpack.c.l.b16 %v419
        %v452 = vunpack.c.l.b16 %v420
        %v453 = vunpack.c.l.b16 %v421
        %v454 = vunpack.c.l.b16 %v422
        %v455 = vunpack.c.l.b16 %v423
        %v456 = vunpack.c.l.b16 %v424
        %v457 = vunpack.c.l.b16 %v425
        %v458 = vunpack.c.l.b16 %v426
        %v459 = vunpack.c.l.b16 %v427
        %v460 = vunpack.c.l.b16 %v428
        %v461 = vunpack.c.l.b16 %v429
        %v462 = vunpack.c.l.b16 %v430
        %v463 = vpack.c.b16 %v448, %v447
        %v464 = vpack.c.b16 %v450, %v449
        %v465 = vpack.c.b16 %v452, %v451
        %v466 = vpack.c.b16 %v454, %v453
        %v467 = vpack.c.b16 %v456, %v455
        %v468 = vpack.c.b16 %v458, %v457
        %v469 = vpack.c.b16 %v460, %v459
        %v470 = vpack.c.b16 %v462, %v461
        %479 = vmatpush.bf16.msra.mxu0 %v470
        %480 = vmatpush.bf16.msra.mxu0 %v469
        %481 = vmatpush.bf16.msra.mxu0 %v468
        %482 = vmatpush.bf16.msra.mxu0 %v467
        %483 = vmatpush.bf16.msra.mxu0 %v466
        %484 = vmatpush.bf16.msra.mxu0 %v465
        %485 = vmatpush.bf16.msra.mxu0 %v464
        %486 = vmatpush.bf16.msra.mxu0 %v463
        %487 = vmatmul.bf16.gmra.mxu0 %v411
        %v488 = vpop.f32.mrf.mxu0
        %v489 = vadd.f32 0.0, %v488
        %v490 = vpop.f32.mrf.mxu0
        %v491 = vadd.f32 0.0, %v490
        %492 = vmatmul.bf16.gmra.mxu0 %v412
        %v493 = vpop.f32.mrf.mxu0
        %v494 = vadd.f32 0.0, %v493
        %v495 = vpop.f32.mrf.mxu0
        %v496 = vadd.f32 0.0, %v495
        %497 = vmatmul.bf16.gmra.mxu0 %v413
        %v498 = vpop.f32.mrf.mxu0
        %v499 = vadd.f32 0.0, %v498
        %v500 = vpop.f32.mrf.mxu0
        %501 = vdwg.mxu0
        %v518 = vunpack.c.l.b16 %v390
        %v519 = vunpack.c.l.b16 %v391
        %v520 = vunpack.c.l.b16 %v392
        %v521 = vunpack.c.l.b16 %v393
        %v522 = vunpack.c.l.b16 %v394
        %v523 = vunpack.c.l.b16 %v395
        %v524 = vunpack.c.l.b16 %v396
        %v525 = vunpack.c.l.b16 %v397
        %v526 = vunpack.c.l.b16 %v398
        %v527 = vunpack.c.l.b16 %v399
        %v528 = vunpack.c.l.b16 %v400
        %v529 = vunpack.c.l.b16 %v401
        %v530 = vunpack.c.l.b16 %v402
        %v531 = vunpack.c.l.b16 %v403
        %v532 = vunpack.c.l.b16 %v404
        %v533 = vunpack.c.l.b16 %v405
        %v534 = vpack.c.b16 %v519, %v518
        %v535 = vpack.c.b16 %v521, %v520
        %v536 = vpack.c.b16 %v523, %v522
        %v537 = vpack.c.b16 %v525, %v524
        %v538 = vpack.c.b16 %v527, %v526
        %v539 = vpack.c.b16 %v529, %v528
        %v540 = vpack.c.b16 %v531, %v530
        %v541 = vpack.c.b16 %v533, %v532
        %550 = vmatpush.bf16.msra.mxu0 %v541
        %551 = vmatpush.bf16.msra.mxu0 %v540
        %552 = vmatpush.bf16.msra.mxu0 %v539
        %553 = vmatpush.bf16.msra.mxu0 %v538
        %554 = vmatpush.bf16.msra.mxu0 %v537
        %555 = vmatpush.bf16.msra.mxu0 %v536
        %556 = vmatpush.bf16.msra.mxu0 %v535
        %557 = vmatpush.bf16.msra.mxu0 %v534
        %558 = vmatmul.bf16.gmra.mxu0 %v387
        %v559 = vpop.f32.mrf.mxu0
        %v560 = vadd.f32 %v489, %v559
        %v561 = vpop.f32.mrf.mxu0
        %v562 = vadd.f32 %v491, %v561
        %563 = vmatmul.bf16.gmra.mxu0 %v388
        %v564 = vpop.f32.mrf.mxu0
        %v565 = vadd.f32 %v494, %v564
        %v566 = vpop.f32.mrf.mxu0
        %v567 = vadd.f32 %v496, %v566
        %568 = vmatmul.bf16.gmra.mxu0 %v389
        %v569 = vpop.f32.mrf.mxu0
        %v570 = vadd.f32 %v499, %v569
        %v571 = vpop.f32.mrf.mxu0
        %572 = vdwg.mxu0
        %v573 = vld [vmem:[#allocation2 + $0x2] sm:$0xff]
        %v574 = vld [vmem:[#allocation2 + $0xa] sm:$0xff]
        %v575 = vld [vmem:[#allocation2 + $0x12] sm:$0xff]
        %v576 = vld [vmem:[#allocation2 + $0x1a] sm:$0xff]
        %v577 = vld [vmem:[#allocation2 + $0x22] sm:$0x7]
        %v578 = vpack.c.bf16 %v574, %v573
        %v579 = vpack.c.bf16 %v576, %v575
        %v580 = vpack.c.bf16 %v577, %v577
        %s581 = scalar_lea.vmem [#allocation9], 128
        %v582 = vld [vmem:[%s581] sm:$0xf]
        %v583 = vld [vmem:[%s581 + $0x4] sm:$0xf]
        %v584 = vld [vmem:[%s581 + $0x8] sm:$0xf]
        %v585 = vld [vmem:[%s581 + $0xc] sm:$0xf]
        %v586 = vld [vmem:[%s581 + $0x10] sm:$0xf]
        %v587 = vld [vmem:[%s581 + $0x14] sm:$0xf]
        %v588 = vld [vmem:[%s581 + $0x18] sm:$0xf]
        %v589 = vld [vmem:[%s581 + $0x1c] sm:$0xf]
        %v590 = vld [vmem:[%s581 + $0x20] sm:$0xf]
        %v591 = vld [vmem:[%s581 + $0x24] sm:$0xf]
        %v592 = vld [vmem:[%s581 + $0x28] sm:$0xf]
        %v593 = vld [vmem:[%s581 + $0x2c] sm:$0xf]
        %v594 = vld [vmem:[%s581 + $0x30] sm:$0xf]
        %v595 = vld [vmem:[%s581 + $0x34] sm:$0xf]
        %v596 = vld [vmem:[%s581 + $0x38] sm:$0xf]
        %v597 = vld [vmem:[%s581 + $0x3c] sm:$0xf]
        %v614 = vunpack.c.l.b16 %v582
        %v615 = vunpack.c.l.b16 %v583
        %v616 = vunpack.c.l.b16 %v584
        %v617 = vunpack.c.l.b16 %v585
        %v618 = vunpack.c.l.b16 %v586
        %v619 = vunpack.c.l.b16 %v587
        %v620 = vunpack.c.l.b16 %v588
        %v621 = vunpack.c.l.b16 %v589
        %v622 = vunpack.c.l.b16 %v590
        %v623 = vunpack.c.l.b16 %v591
        %v624 = vunpack.c.l.b16 %v592
        %v625 = vunpack.c.l.b16 %v593
        %v626 = vunpack.c.l.b16 %v594
        %v627 = vunpack.c.l.b16 %v595
        %v628 = vunpack.c.l.b16 %v596
        %v629 = vunpack.c.l.b16 %v597
        %v630 = vpack.c.b16 %v615, %v614
        %v631 = vpack.c.b16 %v617, %v616
        %v632 = vpack.c.b16 %v619, %v618
        %v633 = vpack.c.b16 %v621, %v620
        %v634 = vpack.c.b16 %v623, %v622
        %v635 = vpack.c.b16 %v625, %v624
        %v636 = vpack.c.b16 %v627, %v626
        %v637 = vpack.c.b16 %v629, %v628
        %646 = vmatpush.bf16.msra.mxu0 %v637
        %647 = vmatpush.bf16.msra.mxu0 %v636
        %648 = vmatpush.bf16.msra.mxu0 %v635
        %649 = vmatpush.bf16.msra.mxu0 %v634
        %650 = vmatpush.bf16.msra.mxu0 %v633
        %651 = vmatpush.bf16.msra.mxu0 %v632
        %652 = vmatpush.bf16.msra.mxu0 %v631
        %653 = vmatpush.bf16.msra.mxu0 %v630
        %654 = vmatmul.bf16.gmra.mxu0 %v578
        %v655 = vpop.f32.mrf.mxu0
        %v656 = vadd.f32 0.0, %v655
        %v657 = vpop.f32.mrf.mxu0
        %v658 = vadd.f32 0.0, %v657
        %659 = vmatmul.bf16.gmra.mxu0 %v579
        %v660 = vpop.f32.mrf.mxu0
        %v661 = vadd.f32 0.0, %v660
        %v662 = vpop.f32.mrf.mxu0
        %v663 = vadd.f32 0.0, %v662
        %664 = vmatmul.bf16.gmra.mxu0 %v580
        %v665 = vpop.f32.mrf.mxu0
        %v666 = vadd.f32 0.0, %v665
        %v667 = vpop.f32.mrf.mxu0
        %668 = vdwg.mxu0
        %v669 = vadd.f32 %v560, %v656
        %v670 = vadd.f32 %v562, %v658
        %v671 = vadd.f32 %v565, %v661
        %v672 = vadd.f32 %v567, %v663
        %v673 = vadd.f32 %v570, %v666
        %v674 = vld [vmem:[%s4] sm:$0x1]
        %v676 = vperm.slane %v674, 0
        %v678 = vadd.f32 %v669, %v676
        %v679 = vadd.f32 %v670, %v676
        %v680 = vadd.f32 %v671, %v676
        %v681 = vadd.f32 %v672, %v676
        %v682 = vadd.f32 %v673, %v676
        %v683 = vmax.f32 %v678, 0.0
        %v684 = vmax.f32 %v679, 0.0
        %v685 = vmax.f32 %v680, 0.0
        %v686 = vmax.f32 %v681, 0.0
        %v687 = vmax.f32 %v682, 0.0
        %688 = vst [vmem:[#allocation3 + $0x1] sm:$0xff] %v683
        %689 = vst [vmem:[#allocation3 + $0x9] sm:$0xff] %v684
        %690 = vst [vmem:[#allocation3 + $0x11] sm:$0xff] %v685
        %691 = vst [vmem:[#allocation3 + $0x19] sm:$0xff] %v686
        %692 = vst [vmem:[#allocation3 + $0x21] sm:$0x7] %v687
        %693 = vst [vmem:[#allocation3] sm:$0x1] 0.0
        %694 = vst [vmem:[#allocation3 + $0x9] sm:$0x1] 0.0
        %695 = vst [vmem:[#allocation3 + $0x12] sm:$0x1] 0.0
        %696 = vst [vmem:[#allocation3 + $0x1b] sm:$0x1] 0.0
        %697 = vst [vmem:[#allocation3 + $0x24] sm:$0x1] 0.0
        %v698 = vld [vmem:[#allocation3] sm:$0xff]
        %v699 = vld [vmem:[#allocation3 + $0x8] sm:$0xff]
        %v700 = vld [vmem:[#allocation3 + $0x10] sm:$0xff]
        %v701 = vld [vmem:[#allocation3 + $0x18] sm:$0xff]
        %v702 = vld [vmem:[#allocation3 + $0x20] sm:$0x7]
        %v703 = vpack.c.bf16 %v699, %v698
        %v704 = vpack.c.bf16 %v701, %v700
        %v705 = vpack.c.bf16 %v702, %v702
        %v706 = vld [vmem:[#allocation10] sm:$0xf]
        %v707 = vld [vmem:[#allocation10 + $0x4] sm:$0xf]
        %v708 = vld [vmem:[#allocation10 + $0x8] sm:$0xf]
        %v709 = vld [vmem:[#allocation10 + $0xc] sm:$0xf]
        %v710 = vld [vmem:[#allocation10 + $0x10] sm:$0xf]
        %v711 = vld [vmem:[#allocation10 + $0x14] sm:$0xf]
        %v712 = vld [vmem:[#allocation10 + $0x18] sm:$0xf]
        %v713 = vld [vmem:[#allocation10 + $0x1c] sm:$0xf]
        %v714 = vld [vmem:[#allocation10 + $0x20] sm:$0xf]
        %v715 = vld [vmem:[#allocation10 + $0x24] sm:$0xf]
        %v716 = vld [vmem:[#allocation10 + $0x28] sm:$0xf]
        %v717 = vld [vmem:[#allocation10 + $0x2c] sm:$0xf]
        %v718 = vld [vmem:[#allocation10 + $0x30] sm:$0xf]
        %v719 = vld [vmem:[#allocation10 + $0x34] sm:$0xf]
        %v720 = vld [vmem:[#allocation10 + $0x38] sm:$0xf]
        %v721 = vld [vmem:[#allocation10 + $0x3c] sm:$0xf]
        %v722 = vld [vmem:[#allocation3 + $0x1] sm:$0xff]
        %v723 = vld [vmem:[#allocation3 + $0x9] sm:$0xff]
        %v724 = vld [vmem:[#allocation3 + $0x11] sm:$0xff]
        %v725 = vld [vmem:[#allocation3 + $0x19] sm:$0xff]
        %v726 = vld [vmem:[#allocation3 + $0x21] sm:$0x7]
        %v727 = vpack.c.bf16 %v723, %v722
        %v728 = vpack.c.bf16 %v725, %v724
        %v729 = vpack.c.bf16 %v726, %v726
        %s730 = scalar_lea.vmem [#allocation10], 64
        %v731 = vld [vmem:[%s730] sm:$0xf]
        %v732 = vld [vmem:[%s730 + $0x4] sm:$0xf]
        %v733 = vld [vmem:[%s730 + $0x8] sm:$0xf]
        %v734 = vld [vmem:[%s730 + $0xc] sm:$0xf]
        %v735 = vld [vmem:[%s730 + $0x10] sm:$0xf]
        %v736 = vld [vmem:[%s730 + $0x14] sm:$0xf]
        %v737 = vld [vmem:[%s730 + $0x18] sm:$0xf]
        %v738 = vld [vmem:[%s730 + $0x1c] sm:$0xf]
        %v739 = vld [vmem:[%s730 + $0x20] sm:$0xf]
        %v740 = vld [vmem:[%s730 + $0x24] sm:$0xf]
        %v741 = vld [vmem:[%s730 + $0x28] sm:$0xf]
        %v742 = vld [vmem:[%s730 + $0x2c] sm:$0xf]
        %v743 = vld [vmem:[%s730 + $0x30] sm:$0xf]
        %v744 = vld [vmem:[%s730 + $0x34] sm:$0xf]
        %v745 = vld [vmem:[%s730 + $0x38] sm:$0xf]
        %v746 = vld [vmem:[%s730 + $0x3c] sm:$0xf]
        %v763 = vunpack.c.l.b16 %v731
        %v764 = vunpack.c.l.b16 %v732
        %v765 = vunpack.c.l.b16 %v733
        %v766 = vunpack.c.l.b16 %v734
        %v767 = vunpack.c.l.b16 %v735
        %v768 = vunpack.c.l.b16 %v736
        %v769 = vunpack.c.l.b16 %v737
        %v770 = vunpack.c.l.b16 %v738
        %v771 = vunpack.c.l.b16 %v739
        %v772 = vunpack.c.l.b16 %v740
        %v773 = vunpack.c.l.b16 %v741
        %v774 = vunpack.c.l.b16 %v742
        %v775 = vunpack.c.l.b16 %v743
        %v776 = vunpack.c.l.b16 %v744
        %v777 = vunpack.c.l.b16 %v745
        %v778 = vunpack.c.l.b16 %v746
        %v779 = vpack.c.b16 %v764, %v763
        %v780 = vpack.c.b16 %v766, %v765
        %v781 = vpack.c.b16 %v768, %v767
        %v782 = vpack.c.b16 %v770, %v769
        %v783 = vpack.c.b16 %v772, %v771
        %v784 = vpack.c.b16 %v774, %v773
        %v785 = vpack.c.b16 %v776, %v775
        %v786 = vpack.c.b16 %v778, %v777
        %795 = vmatpush.bf16.msra.mxu0 %v786
        %796 = vmatpush.bf16.msra.mxu0 %v785
        %797 = vmatpush.bf16.msra.mxu0 %v784
        %798 = vmatpush.bf16.msra.mxu0 %v783
        %799 = vmatpush.bf16.msra.mxu0 %v782
        %800 = vmatpush.bf16.msra.mxu0 %v781
        %801 = vmatpush.bf16.msra.mxu0 %v780
        %802 = vmatpush.bf16.msra.mxu0 %v779
        %803 = vmatmul.bf16.gmra.mxu0 %v727
        %v804 = vpop.f32.mrf.mxu0
        %v805 = vadd.f32 0.0, %v804
        %v806 = vpop.f32.mrf.mxu0
        %v807 = vadd.f32 0.0, %v806
        %808 = vmatmul.bf16.gmra.mxu0 %v728
        %v809 = vpop.f32.mrf.mxu0
        %v810 = vadd.f32 0.0, %v809
        %v811 = vpop.f32.mrf.mxu0
        %v812 = vadd.f32 0.0, %v811
        %813 = vmatmul.bf16.gmra.mxu0 %v729
        %v814 = vpop.f32.mrf.mxu0
        %v815 = vadd.f32 0.0, %v814
        %v816 = vpop.f32.mrf.mxu0
        %817 = vdwg.mxu0
        %v834 = vunpack.c.l.b16 %v706
        %v835 = vunpack.c.l.b16 %v707
        %v836 = vunpack.c.l.b16 %v708
        %v837 = vunpack.c.l.b16 %v709
        %v838 = vunpack.c.l.b16 %v710
        %v839 = vunpack.c.l.b16 %v711
        %v840 = vunpack.c.l.b16 %v712
        %v841 = vunpack.c.l.b16 %v713
        %v842 = vunpack.c.l.b16 %v714
        %v843 = vunpack.c.l.b16 %v715
        %v844 = vunpack.c.l.b16 %v716
        %v845 = vunpack.c.l.b16 %v717
        %v846 = vunpack.c.l.b16 %v718
        %v847 = vunpack.c.l.b16 %v719
        %v848 = vunpack.c.l.b16 %v720
        %v849 = vunpack.c.l.b16 %v721
        %v850 = vpack.c.b16 %v835, %v834
        %v851 = vpack.c.b16 %v837, %v836
        %v852 = vpack.c.b16 %v839, %v838
        %v853 = vpack.c.b16 %v841, %v840
        %v854 = vpack.c.b16 %v843, %v842
        %v855 = vpack.c.b16 %v845, %v844
        %v856 = vpack.c.b16 %v847, %v846
        %v857 = vpack.c.b16 %v849, %v848
        %866 = vmatpush.bf16.msra.mxu0 %v857
        %867 = vmatpush.bf16.msra.mxu0 %v856
        %868 = vmatpush.bf16.msra.mxu0 %v855
        %869 = vmatpush.bf16.msra.mxu0 %v854
        %870 = vmatpush.bf16.msra.mxu0 %v853
        %871 = vmatpush.bf16.msra.mxu0 %v852
        %872 = vmatpush.bf16.msra.mxu0 %v851
        %873 = vmatpush.bf16.msra.mxu0 %v850
        %874 = vmatmul.bf16.gmra.mxu0 %v703
        %v875 = vpop.f32.mrf.mxu0
        %v876 = vadd.f32 %v805, %v875
        %v877 = vpop.f32.mrf.mxu0
        %v878 = vadd.f32 %v807, %v877
        %879 = vmatmul.bf16.gmra.mxu0 %v704
        %v880 = vpop.f32.mrf.mxu0
        %v881 = vadd.f32 %v810, %v880
        %v882 = vpop.f32.mrf.mxu0
        %v883 = vadd.f32 %v812, %v882
        %884 = vmatmul.bf16.gmra.mxu0 %v705
        %v885 = vpop.f32.mrf.mxu0
        %v886 = vadd.f32 %v815, %v885
        %v887 = vpop.f32.mrf.mxu0
        %888 = vdwg.mxu0
        %v889 = vld [vmem:[#allocation3 + $0x2] sm:$0xff]
        %v890 = vld [vmem:[#allocation3 + $0xa] sm:$0xff]
        %v891 = vld [vmem:[#allocation3 + $0x12] sm:$0xff]
        %v892 = vld [vmem:[#allocation3 + $0x1a] sm:$0xff]
        %v893 = vld [vmem:[#allocation3 + $0x22] sm:$0x7]
        %v894 = vpack.c.bf16 %v890, %v889
        %v895 = vpack.c.bf16 %v892, %v891
        %v896 = vpack.c.bf16 %v893, %v893
        %s897 = scalar_lea.vmem [#allocation10], 128
        %v898 = vld [vmem:[%s897] sm:$0xf]
        %v899 = vld [vmem:[%s897 + $0x4] sm:$0xf]
        %v900 = vld [vmem:[%s897 + $0x8] sm:$0xf]
        %v901 = vld [vmem:[%s897 + $0xc] sm:$0xf]
        %v902 = vld [vmem:[%s897 + $0x10] sm:$0xf]
        %v903 = vld [vmem:[%s897 + $0x14] sm:$0xf]
        %v904 = vld [vmem:[%s897 + $0x18] sm:$0xf]
        %v905 = vld [vmem:[%s897 + $0x1c] sm:$0xf]
        %v906 = vld [vmem:[%s897 + $0x20] sm:$0xf]
        %v907 = vld [vmem:[%s897 + $0x24] sm:$0xf]
        %v908 = vld [vmem:[%s897 + $0x28] sm:$0xf]
        %v909 = vld [vmem:[%s897 + $0x2c] sm:$0xf]
        %v910 = vld [vmem:[%s897 + $0x30] sm:$0xf]
        %v911 = vld [vmem:[%s897 + $0x34] sm:$0xf]
        %v912 = vld [vmem:[%s897 + $0x38] sm:$0xf]
        %v913 = vld [vmem:[%s897 + $0x3c] sm:$0xf]
        %v930 = vunpack.c.l.b16 %v898
        %v931 = vunpack.c.l.b16 %v899
        %v932 = vunpack.c.l.b16 %v900
        %v933 = vunpack.c.l.b16 %v901
        %v934 = vunpack.c.l.b16 %v902
        %v935 = vunpack.c.l.b16 %v903
        %v936 = vunpack.c.l.b16 %v904
        %v937 = vunpack.c.l.b16 %v905
        %v938 = vunpack.c.l.b16 %v906
        %v939 = vunpack.c.l.b16 %v907
        %v940 = vunpack.c.l.b16 %v908
        %v941 = vunpack.c.l.b16 %v909
        %v942 = vunpack.c.l.b16 %v910
        %v943 = vunpack.c.l.b16 %v911
        %v944 = vunpack.c.l.b16 %v912
        %v945 = vunpack.c.l.b16 %v913
        %v946 = vpack.c.b16 %v931, %v930
        %v947 = vpack.c.b16 %v933, %v932
        %v948 = vpack.c.b16 %v935, %v934
        %v949 = vpack.c.b16 %v937, %v936
        %v950 = vpack.c.b16 %v939, %v938
        %v951 = vpack.c.b16 %v941, %v940
        %v952 = vpack.c.b16 %v943, %v942
        %v953 = vpack.c.b16 %v945, %v944
        %962 = vmatpush.bf16.msra.mxu0 %v953
        %963 = vmatpush.bf16.msra.mxu0 %v952
        %964 = vmatpush.bf16.msra.mxu0 %v951
        %965 = vmatpush.bf16.msra.mxu0 %v950
        %966 = vmatpush.bf16.msra.mxu0 %v949
        %967 = vmatpush.bf16.msra.mxu0 %v948
        %968 = vmatpush.bf16.msra.mxu0 %v947
        %969 = vmatpush.bf16.msra.mxu0 %v946
        %970 = vmatmul.bf16.gmra.mxu0 %v894
        %v971 = vpop.f32.mrf.mxu0
        %v972 = vadd.f32 0.0, %v971
        %v973 = vpop.f32.mrf.mxu0
        %v974 = vadd.f32 0.0, %v973
        %975 = vmatmul.bf16.gmra.mxu0 %v895
        %v976 = vpop.f32.mrf.mxu0
        %v977 = vadd.f32 0.0, %v976
        %v978 = vpop.f32.mrf.mxu0
        %v979 = vadd.f32 0.0, %v978
        %980 = vmatmul.bf16.gmra.mxu0 %v896
        %v981 = vpop.f32.mrf.mxu0
        %v982 = vadd.f32 0.0, %v981
        %v983 = vpop.f32.mrf.mxu0
        %984 = vdwg.mxu0
        %v985 = vadd.f32 %v876, %v972
        %v986 = vadd.f32 %v878, %v974
        %v987 = vadd.f32 %v881, %v977
        %v988 = vadd.f32 %v883, %v979
        %v989 = vadd.f32 %v886, %v982
        %v990 = vld [vmem:[%s275] sm:$0xff]
        %v991 = vadd.f32 %v985, %v990
        %992 = vst [vmem:[%s319] sm:$0xff] %v991
        %v993 = vld [vmem:[%s340] sm:$0xff]
        %v995 = vrot.slane %v993, 7
        %v997 = vadd.f32 %v986, %v995
        %v998 = vadd.f32 %v987, %v995
        %s999 = scalar_lea.vmem %s319, 8 [#allocation12]
        %1000 = vst [vmem:[%s999 - $0x1] sm:$0xfe] %v997
        %1001 = vst [vmem:[%s999 + $0x7] sm:$0x1] %v998
        %v1002 = vld [vmem:[%s354] sm:$0xff]
        %v1004 = vrot.slane %v1002, 6
        %v1006 = vadd.f32 %v987, %v1004
        %v1007 = vadd.f32 %v988, %v1004
        %s1008 = scalar_lea.vmem %s319, 16 [#allocation12]
        %1009 = vst [vmem:[%s1008 - $0x2] sm:$0xfc] %v1006
        %1010 = vst [vmem:[%s1008 + $0x6] sm:$0x3] %v1007
        %v1011 = vld [vmem:[%s368] sm:$0xff]
        %v1013 = vrot.slane %v1011, 5
        %v1015 = vadd.f32 %v988, %v1013
        %v1016 = vadd.f32 %v989, %v1013
        %s1017 = scalar_lea.vmem %s319, 24 [#allocation12]
        %1018 = vst [vmem:[%s1017 - $0x3] sm:$0xf8] %v1015
        %1019 = vst [vmem:[%s1017 + $0x5] sm:$0x7] %v1016
        %s1020 = sand.u32 %s164, 1
        %s1021 = scalar_lea.sflag [#allocation6], %s1020
        %s1022 = sand.u32 %s164, 1
        %s1023 = smul.addr %s1022, 32
        %s1024 = scalar_lea.vmem [#allocation12], %s1023
        // Predicated region
        $region61: #{tpu_custom_call.1} parent=43 // pred_check
          %p1025 = pneg %p174
        $region62: #{tpu_custom_call.1} parent=43 // pred_check_branch
          %1027 = sbr.rel (%p1025) target = $region64
        $region63: #{tpu_custom_call.1} parent=43 // pred_region
          %s1028 = smul.u32 4, %s25
          %1030 = vsyncadd %s1021, 0
          %s1031 = smul.addr %s1028, 8
          %s1032 = scalar_lea.hbm %s6, %s1031
          %s1033 = sshll.u32 %s1024, 4
          %s1034 = int_to_ptr.vmem [resolvable:$true] %s1033
          %s1035 = sshll.u32 %s1032, 4
          %s1036 = int_to_ptr.hbm [resolvable:$true] %s1035
          %1041 = dma.vmem_to_hbm [thread:$0]  %s1034, 512, %s1036, %s1021, 128, 128, 8
        $region64: #{tpu_custom_call.1} parent=43 // pred_fallthru
          _
      $region44: #{tpu_custom_call.1} parent=5 // pred_fallthru
        _
      %p1042 = scmp.le.s32.totalorder 2, %s20
      // Predicated region
      $region65: #{tpu_custom_call.1} parent=5 // pred_check
        %p1043 = pneg %p1042
      $region66: #{tpu_custom_call.1} parent=5 // pred_check_branch
        %1045 = sbr.rel (%p1043) target = $region68
      $region67: #{tpu_custom_call.1} parent=5 // pred_region
        %s1046 = ssub.s32 %s20, 2
        // Predicated region
        $region69: #{tpu_custom_call.1} parent=67 // pred_check
          %p1047 = pneg %p180
        $region70: #{tpu_custom_call.1} parent=67 // pred_check_branch
          %1049 = sbr.rel (%p1047) target = $region72
        $region71: #{tpu_custom_call.1} parent=67 // pred_region
          %s1050 = sand.u32 %s165, 1
          %s1051 = scalar_lea.sflag [#allocation6], %s1050
          %s1052 = sand.u32 %s165, 1
          %s1053 = smul.addr %s1052, 32
          %s1054 = scalar_lea.vmem [#allocation12], %s1053
          %1056 = dma.done %s1051, 512
        $region72: #{tpu_custom_call.1} parent=67 // pred_fallthru
          _
      $region68: #{tpu_custom_call.1} parent=5 // pred_fallthru
        _
    $region6: #{tpu_custom_call.1} parent=1 // loop_footer
      %s24 = sadd.s32 1, %s20
    $region7: #{tpu_custom_call.1} parent=1 // loop_footer_branch
      %19 = sbr.rel target = $region3
    $region8: #{tpu_custom_call.1} parent=1 // loop_exit
      _
    %1057 = vsyncpa [#allocation5], 1
    %s1058 = scalar_lea.sflag [#allocation5], 1
    %1059 = vsyncpa %s1058, 1
    %1060 = vsyncpa [#allocation8], 1
    %1061 = vsyncpa [#allocation11], 1
    %1062 = vsyncpa [#allocation6], 1
    %s1063 = scalar_lea.sflag [#allocation6], 1
    %1064 = vsyncpa %s1063, 1

</llo_original>
